<compile_context>
chip_gen: v7x
topology: tpu7x:2x2x1
jax: 0.10.0
libtpu: 0.0.40
codegen_flags: <defaults>
</compile_context>

<pallas_src>
import functools

import jax
import jax.numpy as jnp
from jax.experimental import pallas as pl
from jax.experimental.pallas import tpu as pltpu

LANE = 128
VMEM_LIMIT_BYTES = 32 * 1024 * 1024  # safe on v5e/v6e (128 MiB) and v7x (64 MiB) parts


def _round_up(x, m):
    return ((x + m - 1) // m) * m


# --------------------------------------------------------------------------------------
# Kernel 1: dense projection  O = X @ W   (row-tiled, f32 accumulation, bf16 output)
# --------------------------------------------------------------------------------------
def _project_kernel(x_ref, w_ref, o_ref):
    o_ref[...] = jnp.dot(
        x_ref[...], w_ref[...], preferred_element_type=jnp.float32
    ).astype(o_ref.dtype)


def _project(x, w, *, tm):
    n_pad, f_in = x.shape
    _, h_pad = w.shape
    grid = (n_pad // tm,)
    return pl.pallas_call(
        _project_kernel,
        out_shape=jax.ShapeDtypeStruct((n_pad, h_pad), jnp.bfloat16),
        grid_spec=pltpu.PrefetchScalarGridSpec(
            num_scalar_prefetch=0,
            grid=grid,
            in_specs=[
                pl.BlockSpec((tm, f_in), lambda i: (i, 0)),
                pl.BlockSpec((f_in, h_pad), lambda i: (0, 0)),
            ],
            out_specs=pl.BlockSpec((tm, h_pad), lambda i: (i, 0)),
        ),
        compiler_params=pltpu.CompilerParams(
            dimension_semantics=("parallel",),
            vmem_limit_bytes=VMEM_LIMIT_BYTES,
        ),
    )(x, w)


# --------------------------------------------------------------------------------------
# Kernel 2: tiled aggregation  Z = A @ XW + b, then ReLU (layer 1) or masked
#           log_softmax (layer 2).  grid = (row tiles, k reduction tiles).
# --------------------------------------------------------------------------------------
def _make_aggregate_kernel(apply_relu, num_valid_cols):
    def kernel(a_ref, xw_ref, b_ref, o_ref, acc_ref):
        k = pl.program_id(1)

        @pl.when(k == 0)
        def _():
            acc_ref[...] = jnp.zeros_like(acc_ref)

        # bf16 x bf16 -> f32 MXU accumulation of the A-tile contraction.
        acc_ref[...] += jnp.dot(
            a_ref[...], xw_ref[...], preferred_element_type=jnp.float32
        )

        @pl.when(k == pl.num_programs(1) - 1)
        def _():
            z = acc_ref[...] + b_ref[...]  # bias kept in f32
            if apply_relu:
                o_ref[...] = jnp.maximum(z, 0.0).astype(o_ref.dtype)
            else:
                # log_softmax over the first num_valid_cols lanes only (rest is lane pad).
                col = jax.lax.broadcasted_iota(jnp.int32, z.shape, dimension=1)
                valid = col < num_valid_cols
                zm = jnp.where(valid, z, -jnp.inf)
                m = jnp.max(zm, axis=1, keepdims=True)
                lse = jnp.log(jnp.sum(jnp.exp(zm - m), axis=1, keepdims=True)) + m
                o_ref[...] = jnp.where(valid, z - lse, 0.0).astype(o_ref.dtype)

    return kernel


def _aggregate(a, xw, b, *, tm, tk, apply_relu, num_valid_cols, out_dtype):
    n_pad = a.shape[0]
    h_pad = xw.shape[1]
    grid = (n_pad // tm, n_pad // tk)

    flops = 2 * n_pad * n_pad * h_pad
    transcendentals = 0 if apply_relu else 2 * n_pad * h_pad  # exp + log
    bytes_accessed = int(
        a.size * a.dtype.itemsize
        + xw.size * xw.dtype.itemsize * (n_pad // tm)  # XW streamed once per row tile
        + b.size * b.dtype.itemsize
        + n_pad * h_pad * jnp.dtype(out_dtype).itemsize
    )

    kernel = _make_aggregate_kernel(apply_relu, num_valid_cols)
    return pl.pallas_call(
        kernel,
        out_shape=jax.ShapeDtypeStruct((n_pad, h_pad), out_dtype),
        grid_spec=pltpu.PrefetchScalarGridSpec(
            num_scalar_prefetch=0,
            grid=grid,
            in_specs=[
                pl.BlockSpec((tm, tk), lambda i, k: (i, k)),     # A tile (bf16)
                pl.BlockSpec((tk, h_pad), lambda i, k: (k, 0)),  # XW tile (bf16)
                pl.BlockSpec((1, h_pad), lambda i, k: (0, 0)),   # bias (f32)
            ],
            out_specs=pl.BlockSpec((tm, h_pad), lambda i, k: (i, 0)),
            scratch_shapes=[pltpu.VMEM((tm, h_pad), jnp.float32)],
        ),
        compiler_params=pltpu.CompilerParams(
            dimension_semantics=("parallel", "arbitrary"),
            vmem_limit_bytes=VMEM_LIMIT_BYTES,
        ),
        cost_estimate=pl.CostEstimate(
            flops=flops,
            transcendentals=transcendentals,
            bytes_accessed=bytes_accessed,
        ),
    )(a, xw, b)


# --------------------------------------------------------------------------------------
# Full forward pass
# --------------------------------------------------------------------------------------
@functools.partial(jax.jit, static_argnames=("tm", "tk"))
def gcn_forward(adj, x, w1, b1, w2, b2, *, tm=128, tk=128):
    n, f_in = x.shape
    hidden = w1.shape[1]
    num_classes = w2.shape[1]

    n_pad = _round_up(n, max(tm, tk))
    h_pad = _round_up(hidden, LANE)
    c_pad = _round_up(num_classes, LANE)

    # Pad to tile-aligned shapes; cast MXU operands to bf16 (biases stay f32).
    a_bf = jnp.zeros((n_pad, n_pad), jnp.bfloat16).at[:n, :n].set(adj.astype(jnp.bfloat16))
    x_bf = jnp.zeros((n_pad, f_in), jnp.bfloat16).at[:n, :].set(x.astype(jnp.bfloat16))
    w1_bf = jnp.zeros((f_in, h_pad), jnp.bfloat16).at[:, :hidden].set(w1.astype(jnp.bfloat16))
    b1_p = jnp.zeros((1, h_pad), jnp.float32).at[:, :hidden].set(b1.astype(jnp.float32))
    w2_bf = jnp.zeros((h_pad, c_pad), jnp.bfloat16).at[:hidden, :num_classes].set(
        w2.astype(jnp.bfloat16)
    )
    b2_p = jnp.zeros((1, c_pad), jnp.float32).at[:, :num_classes].set(b2.astype(jnp.float32))

    # Layer 1: h = relu(A @ (X @ W1) + b1)        (dropout is identity in eval mode)
    xw1 = _project(x_bf, w1_bf, tm=tm)                              # [n_pad, h_pad] bf16
    h = _aggregate(a_bf, xw1, b1_p, tm=tm, tk=tk,
                   apply_relu=True, num_valid_cols=h_pad,
                   out_dtype=jnp.bfloat16)                          # [n_pad, h_pad] bf16

    # Layer 2: z = A @ (h @ W2) + b2 ; out = log_softmax(z)
    hw2 = _project(h, w2_bf, tm=tm)                                 # [n_pad, c_pad] bf16
    z = _aggregate(a_bf, hw2, b2_p, tm=tm, tk=tk,
                   apply_relu=False, num_valid_cols=num_classes,
                   out_dtype=jnp.float32)                           # [n_pad, c_pad] f32

    return z[:n, :num_classes]


def build_dense_adjacency(edge_index, edge_weight, num_nodes):
    # A[dst, src] += w  (PyG GCNConv aggregates messages from source j to target i)
    # TODO(synk): for production graphs use a block-sparse format + PrefetchScalarGridSpec
    #             to skip all-zero adjacency tiles instead of a dense N x N matrix.
    src = edge_index[0]
    dst = edge_index[1]
    a = jnp.zeros((num_nodes, num_nodes), dtype=jnp.float32)
    return a.at[dst, src].add(edge_weight)


if __name__ == "__main__":
    key = jax.random.PRNGKey(0)

    # Small synthetic problem sizes implied by the module (N chosen tile-aligned).
    N = 256          # number of graph nodes
    F_IN = 16        # dataset.num_features
    HIDDEN = 32      # args.hidden
    NUM_CLASSES = 8  # dataset.num_classes

    k_x, k_w1, k_w2, k_ew = jax.random.split(key, 4)

    # Node features
    x = jax.random.normal(k_x, (N, F_IN), dtype=jnp.float32)

    # Simple directed ring graph; edge_attr plays the role of the precomputed `norm`.
    src = jnp.arange(N, dtype=jnp.int32)
    dst = jnp.mod(src + 1, N)
    edge_index = jnp.stack([src, dst], axis=0)                # [2, E]
    norm = jax.random.uniform(k_ew, (N,), dtype=jnp.float32)  # edge weights

    adj = build_dense_adjacency(edge_index, norm, N)

    # Deterministic glorot-like parameter init (GCNConv: weight [in, out], bias [out])
    def glorot(k, fan_in, fan_out):
        limit = jnp.sqrt(6.0 / (fan_in + fan_out))
        return jax.random.uniform(k, (fan_in, fan_out), jnp.float32, -limit, limit)

    w1 = glorot(k_w1, F_IN, HIDDEN)
    b1 = jnp.zeros((1, HIDDEN), dtype=jnp.float32)
    w2 = glorot(k_w2, HIDDEN, NUM_CLASSES)
    b2 = jnp.zeros((1, NUM_CLASSES), dtype=jnp.float32)

    out = gcn_forward(adj, x, w1, b1, w2, b2)
    out = jax.block_until_ready(out)

    # Pure-JAX f32 reference (dropout identity in eval mode).
    h_ref = jnp.maximum(adj @ (x @ w1) + b1, 0.0)
    z_ref = adj @ (h_ref @ w2) + b2
    ref = jax.nn.log_softmax(z_ref, axis=1)

    assert out.shape == (N, NUM_CLASSES)
    # Rows must sum to 1 in prob space (exact property of log_softmax in f32).
    row_prob = jnp.sum(jnp.exp(out), axis=1)
    assert bool(jnp.all(jnp.abs(row_prob - 1.0) < 1e-4))
    # Loose tolerance vs f32 reference: MXU operands are bf16 by design.
    assert bool(jnp.all(jnp.isfinite(out)))
    assert bool(jnp.max(jnp.abs(out - ref)) < 0.15)

    print("KERNEL_OK")
</pallas_src>

<mosaic_0001>
module attributes {stable_mosaic.version = 11 : i64} {
  func.func @_project_kernel(%arg0: i32, %arg1: memref<128x16xbf16, #tpu.memory_space<vmem>>, %arg2: memref<16x128xbf16, #tpu.memory_space<vmem>>, %arg3: memref<128x128xbf16, #tpu.memory_space<vmem>>) attributes {dimension_semantics = [#tpu.dimension_semantics<parallel>], iteration_bounds = array<i64: 2>, scalar_prefetch = 0 : i64, scratch_operands = 0 : i64, tpu.core_type = #tpu.core_type<tc>, window_params = [{transform_indices = @transform_0, window_bounds = array<i64: 128, 16>}, {pipeline_mode = #tpu.pipeline_mode<synchronous>, transform_indices = @transform_1, window_bounds = array<i64: 16, 128>}, {transform_indices = @transform_2, window_bounds = array<i64: 128, 128>}]} {
    %c0 = arith.constant 0 : index
    %c0_0 = arith.constant 0 : index
    %0 = vector.load %arg1[%c0, %c0_0] : memref<128x16xbf16, #tpu.memory_space<vmem>>, vector<128x16xbf16>
    %c0_1 = arith.constant 0 : index
    %c0_2 = arith.constant 0 : index
    %1 = vector.load %arg2[%c0_1, %c0_2] : memref<16x128xbf16, #tpu.memory_space<vmem>>, vector<16x128xbf16>
    %cst = arith.constant dense<0.000000e+00> : vector<128x128xf32>
    %2 = tpu.matmul %0, %1, %cst {dimension_numbers = #tpu.dot_dimension_numbers<[1], [0], [0], [1], [0, 0, 1, 1], [], []>} : vector<128x16xbf16>, vector<16x128xbf16>, vector<128x128xf32> -> vector<128x128xf32>
    %3 = arith.truncf %2 : vector<128x128xf32> to vector<128x128xbf16>
    %c0_3 = arith.constant 0 : index
    %c0_4 = arith.constant 0 : index
    %4 = vector.load %arg3[%c0_3, %c0_4] : memref<128x128xbf16, #tpu.memory_space<vmem>>, vector<128x128xbf16>
    tpu.vector_store %arg3[%c0_3, %c0_4], %3 {strides = array<i32>} : memref<128x128xbf16, #tpu.memory_space<vmem>>, vector<128x128xbf16>,
    return
  }
  func.func @transform_0(%arg0: i32) -> (i32, i32) {
    %c0_i32 = arith.constant 0 : i32
    %c0_i32_0 = arith.constant 0 : i32
    return %arg0, %c0_i32 : i32, i32
  }
  func.func @transform_1(%arg0: i32) -> (i32, i32) {
    %c0_i32 = arith.constant 0 : i32
    %c0_i32_0 = arith.constant 0 : i32
    %c0_i32_1 = arith.constant 0 : i32
    return %c0_i32, %c0_i32_0 : i32, i32
  }
  func.func @transform_2(%arg0: i32) -> (i32, i32) {
    %c0_i32 = arith.constant 0 : i32
    %c0_i32_0 = arith.constant 0 : i32
    return %arg0, %c0_i32 : i32, i32
  }
}

module attributes {stable_mosaic.version = 11 : i64} {
  func.func @kernel(%arg0: i32, %arg1: i32, %arg2: memref<128x128xbf16, #tpu.memory_space<vmem>>, %arg3: memref<128x128xbf16, #tpu.memory_space<vmem>>, %arg4: memref<1x128xf32, #tpu.memory_space<vmem>>, %arg5: memref<128x128xbf16, #tpu.memory_space<vmem>>, %arg6: memref<128x128xf32, #tpu.memory_space<vmem>>) attributes {dimension_semantics = [#tpu.dimension_semantics<parallel>, #tpu.dimension_semantics<arbitrary>], iteration_bounds = array<i64: 2, 2>, scalar_prefetch = 0 : i64, scratch_operands = 1 : i64, tpu.core_type = #tpu.core_type<tc>, window_params = [{transform_indices = @transform_0, window_bounds = array<i64: 128, 128>}, {transform_indices = @transform_1, window_bounds = array<i64: 128, 128>}, {pipeline_mode = #tpu.pipeline_mode<synchronous>, transform_indices = @transform_2, window_bounds = array<i64: 1, 128>}, {transform_indices = @transform_3, window_bounds = array<i64: 128, 128>}]} {
    %c0_i32 = arith.constant 0 : i32
    %0 = arith.cmpi eq, %arg1, %c0_i32 : i32
    %1 = arith.extui %0 : i1 to i32
    %c0_i32_0 = arith.constant 0 : i32
    %2 = arith.cmpi ne, %1, %c0_i32_0 : i32
    scf.if %2 {
      %cst_9 = arith.constant 0.000000e+00 : f32
      %12 = vector.broadcast %cst_9 : f32 to vector<128x128xf32>
      %c0_10 = arith.constant 0 : index
      %c0_11 = arith.constant 0 : index
      %13 = vector.load %arg6[%c0_10, %c0_11] : memref<128x128xf32, #tpu.memory_space<vmem>>, vector<128x128xf32>
      tpu.vector_store %arg6[%c0_10, %c0_11], %12 {strides = array<i32>} : memref<128x128xf32, #tpu.memory_space<vmem>>, vector<128x128xf32>,
    } else {
    }
    %c0 = arith.constant 0 : index
    %c0_1 = arith.constant 0 : index
    %3 = vector.load %arg6[%c0, %c0_1] : memref<128x128xf32, #tpu.memory_space<vmem>>, vector<128x128xf32>
    %c0_2 = arith.constant 0 : index
    %c0_3 = arith.constant 0 : index
    %4 = vector.load %arg2[%c0_2, %c0_3] : memref<128x128xbf16, #tpu.memory_space<vmem>>, vector<128x128xbf16>
    %c0_4 = arith.constant 0 : index
    %c0_5 = arith.constant 0 : index
    %5 = vector.load %arg3[%c0_4, %c0_5] : memref<128x128xbf16, #tpu.memory_space<vmem>>, vector<128x128xbf16>
    %cst = arith.constant dense<0.000000e+00> : vector<128x128xf32>
    %6 = tpu.matmul %4, %5, %cst {dimension_numbers = #tpu.dot_dimension_numbers<[1], [0], [0], [1], [0, 0, 1, 1], [], []>} : vector<128x128xbf16>, vector<128x128xbf16>, vector<128x128xf32> -> vector<128x128xf32>
    %7 = arith.addf %3, %6 : vector<128x128xf32>
    %c0_6 = arith.constant 0 : index
    %c0_7 = arith.constant 0 : index
    %8 = vector.load %arg6[%c0_6, %c0_7] : memref<128x128xf32, #tpu.memory_space<vmem>>, vector<128x128xf32>
    tpu.vector_store %arg6[%c0_6, %c0_7], %7 {strides = array<i32>} : memref<128x128xf32, #tpu.memory_space<vmem>>, vector<128x128xf32>,
    %c1_i32 = arith.constant 1 : i32
    %9 = arith.cmpi eq, %arg1, %c1_i32 : i32
    %10 = arith.extui %9 : i1 to i32
    %c0_i32_8 = arith.constant 0 : i32
    %11 = arith.cmpi ne, %10, %c0_i32_8 : i32
    scf.if %11 {
      %c0_9 = arith.constant 0 : index
      %c0_10 = arith.constant 0 : index
      %12 = vector.load %arg6[%c0_9, %c0_10] : memref<128x128xf32, #tpu.memory_space<vmem>>, vector<128x128xf32>
      %c0_11 = arith.constant 0 : index
      %c0_12 = arith.constant 0 : index
      %13 = vector.load %arg4[%c0_11, %c0_12] : memref<1x128xf32, #tpu.memory_space<vmem>>, vector<1x128xf32>
      %14 = vector.broadcast %13 : vector<1x128xf32> to vector<128x128xf32>
      %15 = arith.addf %12, %14 : vector<128x128xf32>
      %cst_13 = arith.constant 0.000000e+00 : f32
      %16 = vector.broadcast %cst_13 : f32 to vector<128x128xf32>
      %17 = arith.maximumf %15, %16 : vector<128x128xf32>
      %18 = arith.truncf %17 : vector<128x128xf32> to vector<128x128xbf16>
      %c0_14 = arith.constant 0 : index
      %c0_15 = arith.constant 0 : index
      %19 = vector.load %arg5[%c0_14, %c0_15] : memref<128x128xbf16, #tpu.memory_space<vmem>>, vector<128x128xbf16>
      tpu.vector_store %arg5[%c0_14, %c0_15], %18 {strides = array<i32>} : memref<128x128xbf16, #tpu.memory_space<vmem>>, vector<128x128xbf16>,
    } else {
    }
    return
  }
  func.func @transform_0(%arg0: i32, %arg1: i32) -> (i32, i32) {
    %c0_i32 = arith.constant 0 : i32
    return %arg0, %arg1 : i32, i32
  }
  func.func @transform_1(%arg0: i32, %arg1: i32) -> (i32, i32) {
    %c0_i32 = arith.constant 0 : i32
    %c0_i32_0 = arith.constant 0 : i32
    return %arg1, %c0_i32 : i32, i32
  }
  func.func @transform_2(%arg0: i32, %arg1: i32) -> (i32, i32) {
    %c0_i32 = arith.constant 0 : i32
    %c0_i32_0 = arith.constant 0 : i32
    %c0_i32_1 = arith.constant 0 : i32
    return %c0_i32, %c0_i32_0 : i32, i32
  }
  func.func @transform_3(%arg0: i32, %arg1: i32) -> (i32, i32) {
    %c0_i32 = arith.constant 0 : i32
    %c0_i32_0 = arith.constant 0 : i32
    return %arg0, %c0_i32 : i32, i32
  }
}

module attributes {stable_mosaic.version = 11 : i64} {
  func.func @_project_kernel(%arg0: i32, %arg1: memref<128x128xbf16, #tpu.memory_space<vmem>>, %arg2: memref<128x128xbf16, #tpu.memory_space<vmem>>, %arg3: memref<128x128xbf16, #tpu.memory_space<vmem>>) attributes {dimension_semantics = [#tpu.dimension_semantics<parallel>], iteration_bounds = array<i64: 2>, scalar_prefetch = 0 : i64, scratch_operands = 0 : i64, tpu.core_type = #tpu.core_type<tc>, window_params = [{transform_indices = @transform_0, window_bounds = array<i64: 128, 128>}, {pipeline_mode = #tpu.pipeline_mode<synchronous>, transform_indices = @transform_1, window_bounds = array<i64: 128, 128>}, {transform_indices = @transform_2, window_bounds = array<i64: 128, 128>}]} {
    %c0 = arith.constant 0 : index
    %c0_0 = arith.constant 0 : index
    %0 = vector.load %arg1[%c0, %c0_0] : memref<128x128xbf16, #tpu.memory_space<vmem>>, vector<128x128xbf16>
    %c0_1 = arith.constant 0 : index
    %c0_2 = arith.constant 0 : index
    %1 = vector.load %arg2[%c0_1, %c0_2] : memref<128x128xbf16, #tpu.memory_space<vmem>>, vector<128x128xbf16>
    %cst = arith.constant dense<0.000000e+00> : vector<128x128xf32>
    %2 = tpu.matmul %0, %1, %cst {dimension_numbers = #tpu.dot_dimension_numbers<[1], [0], [0], [1], [0, 0, 1, 1], [], []>} : vector<128x128xbf16>, vector<128x128xbf16>, vector<128x128xf32> -> vector<128x128xf32>
    %3 = arith.truncf %2 : vector<128x128xf32> to vector<128x128xbf16>
    %c0_3 = arith.constant 0 : index
    %c0_4 = arith.constant 0 : index
    %4 = vector.load %arg3[%c0_3, %c0_4] : memref<128x128xbf16, #tpu.memory_space<vmem>>, vector<128x128xbf16>
    tpu.vector_store %arg3[%c0_3, %c0_4], %3 {strides = array<i32>} : memref<128x128xbf16, #tpu.memory_space<vmem>>, vector<128x128xbf16>,
    return
  }
  func.func @transform_0(%arg0: i32) -> (i32, i32) {
    %c0_i32 = arith.constant 0 : i32
    %c0_i32_0 = arith.constant 0 : i32
    return %arg0, %c0_i32 : i32, i32
  }
  func.func @transform_1(%arg0: i32) -> (i32, i32) {
    %c0_i32 = arith.constant 0 : i32
    %c0_i32_0 = arith.constant 0 : i32
    %c0_i32_1 = arith.constant 0 : i32
    return %c0_i32, %c0_i32_0 : i32, i32
  }
  func.func @transform_2(%arg0: i32) -> (i32, i32) {
    %c0_i32 = arith.constant 0 : i32
    %c0_i32_0 = arith.constant 0 : i32
    return %arg0, %c0_i32 : i32, i32
  }
}

module attributes {stable_mosaic.version = 11 : i64} {
  func.func @kernel(%arg0: i32, %arg1: i32, %arg2: memref<128x128xbf16, #tpu.memory_space<vmem>>, %arg3: memref<128x128xbf16, #tpu.memory_space<vmem>>, %arg4: memref<1x128xf32, #tpu.memory_space<vmem>>, %arg5: memref<128x128xf32, #tpu.memory_space<vmem>>, %arg6: memref<128x128xf32, #tpu.memory_space<vmem>>) attributes {dimension_semantics = [#tpu.dimension_semantics<parallel>, #tpu.dimension_semantics<arbitrary>], iteration_bounds = array<i64: 2, 2>, scalar_prefetch = 0 : i64, scratch_operands = 1 : i64, tpu.core_type = #tpu.core_type<tc>, window_params = [{transform_indices = @transform_0, window_bounds = array<i64: 128, 128>}, {transform_indices = @transform_1, window_bounds = array<i64: 128, 128>}, {pipeline_mode = #tpu.pipeline_mode<synchronous>, transform_indices = @transform_2, window_bounds = array<i64: 1, 128>}, {transform_indices = @transform_3, window_bounds = array<i64: 128, 128>}]} {
    %c0_i32 = arith.constant 0 : i32
    %0 = arith.cmpi eq, %arg1, %c0_i32 : i32
    %1 = arith.extui %0 : i1 to i32
    %c0_i32_0 = arith.constant 0 : i32
    %2 = arith.cmpi ne, %1, %c0_i32_0 : i32
    scf.if %2 {
      %cst_9 = arith.constant 0.000000e+00 : f32
      %12 = vector.broadcast %cst_9 : f32 to vector<128x128xf32>
      %c0_10 = arith.constant 0 : index
      %c0_11 = arith.constant 0 : index
      %13 = vector.load %arg6[%c0_10, %c0_11] : memref<128x128xf32, #tpu.memory_space<vmem>>, vector<128x128xf32>
      tpu.vector_store %arg6[%c0_10, %c0_11], %12 {strides = array<i32>} : memref<128x128xf32, #tpu.memory_space<vmem>>, vector<128x128xf32>,
    } else {
    }
    %c0 = arith.constant 0 : index
    %c0_1 = arith.constant 0 : index
    %3 = vector.load %arg6[%c0, %c0_1] : memref<128x128xf32, #tpu.memory_space<vmem>>, vector<128x128xf32>
    %c0_2 = arith.constant 0 : index
    %c0_3 = arith.constant 0 : index
    %4 = vector.load %arg2[%c0_2, %c0_3] : memref<128x128xbf16, #tpu.memory_space<vmem>>, vector<128x128xbf16>
    %c0_4 = arith.constant 0 : index
    %c0_5 = arith.constant 0 : index
    %5 = vector.load %arg3[%c0_4, %c0_5] : memref<128x128xbf16, #tpu.memory_space<vmem>>, vector<128x128xbf16>
    %cst = arith.constant dense<0.000000e+00> : vector<128x128xf32>
    %6 = tpu.matmul %4, %5, %cst {dimension_numbers = #tpu.dot_dimension_numbers<[1], [0], [0], [1], [0, 0, 1, 1], [], []>} : vector<128x128xbf16>, vector<128x128xbf16>, vector<128x128xf32> -> vector<128x128xf32>
    %7 = arith.addf %3, %6 : vector<128x128xf32>
    %c0_6 = arith.constant 0 : index
    %c0_7 = arith.constant 0 : index
    %8 = vector.load %arg6[%c0_6, %c0_7] : memref<128x128xf32, #tpu.memory_space<vmem>>, vector<128x128xf32>
    tpu.vector_store %arg6[%c0_6, %c0_7], %7 {strides = array<i32>} : memref<128x128xf32, #tpu.memory_space<vmem>>, vector<128x128xf32>,
    %c1_i32 = arith.constant 1 : i32
    %9 = arith.cmpi eq, %arg1, %c1_i32 : i32
    %10 = arith.extui %9 : i1 to i32
    %c0_i32_8 = arith.constant 0 : i32
    %11 = arith.cmpi ne, %10, %c0_i32_8 : i32
    scf.if %11 {
      %c0_9 = arith.constant 0 : index
      %c0_10 = arith.constant 0 : index
      %12 = vector.load %arg6[%c0_9, %c0_10] : memref<128x128xf32, #tpu.memory_space<vmem>>, vector<128x128xf32>
      %c0_11 = arith.constant 0 : index
      %c0_12 = arith.constant 0 : index
      %13 = vector.load %arg4[%c0_11, %c0_12] : memref<1x128xf32, #tpu.memory_space<vmem>>, vector<1x128xf32>
      %14 = vector.broadcast %13 : vector<1x128xf32> to vector<128x128xf32>
      %15 = arith.addf %12, %14 : vector<128x128xf32>
      %16 = tpu.iota {dimensions = array<i32: 1>} : vector<128x128xi32>
      %c8_i32 = arith.constant 8 : i32
      %17 = vector.broadcast %c8_i32 : i32 to vector<128x128xi32>
      %18 = arith.cmpi slt, %16, %17 : vector<128x128xi32>
      %cst_13 = arith.constant 0xFF800000 : f32
      %19 = vector.broadcast %cst_13 : f32 to vector<128x128xf32>
      %20 = arith.select %18, %15, %19 : vector<128x128xi1>, vector<128x128xf32>
      %cst_14 = arith.constant dense<0xFF800000> : vector<128xf32>
      %21 = vector.multi_reduction <maximumf>, %20, %cst_14 [1] : vector<128x128xf32> to vector<128xf32>
      %22 = vector.shape_cast %21 : vector<128xf32> to vector<128x1xf32>
      %23 = vector.broadcast %22 : vector<128x1xf32> to vector<128x128xf32>
      %24 = arith.subf %20, %23 : vector<128x128xf32>
      %25 = math.exp %24 : vector<128x128xf32>
      %cst_15 = arith.constant dense<0.000000e+00> : vector<128xf32>
      %26 = vector.multi_reduction <add>, %25, %cst_15 [1] : vector<128x128xf32> to vector<128xf32>
      %27 = vector.shape_cast %26 : vector<128xf32> to vector<128x1xf32>
      %28 = math.log %27 : vector<128x1xf32>
      %29 = arith.addf %28, %22 : vector<128x1xf32>
      %30 = vector.broadcast %29 : vector<128x1xf32> to vector<128x128xf32>
      %31 = arith.subf %15, %30 : vector<128x128xf32>
      %cst_16 = arith.constant 0.000000e+00 : f32
      %32 = vector.broadcast %cst_16 : f32 to vector<128x128xf32>
      %33 = arith.select %18, %31, %32 : vector<128x128xi1>, vector<128x128xf32>
      %c0_17 = arith.constant 0 : index
      %c0_18 = arith.constant 0 : index
      %34 = vector.load %arg5[%c0_17, %c0_18] : memref<128x128xf32, #tpu.memory_space<vmem>>, vector<128x128xf32>
      tpu.vector_store %arg5[%c0_17, %c0_18], %33 {strides = array<i32>} : memref<128x128xf32, #tpu.memory_space<vmem>>, vector<128x128xf32>,
    } else {
    }
    return
  }
  func.func @transform_0(%arg0: i32, %arg1: i32) -> (i32, i32) {
    %c0_i32 = arith.constant 0 : i32
    return %arg0, %arg1 : i32, i32
  }
  func.func @transform_1(%arg0: i32, %arg1: i32) -> (i32, i32) {
    %c0_i32 = arith.constant 0 : i32
    %c0_i32_0 = arith.constant 0 : i32
    return %arg1, %c0_i32 : i32, i32
  }
  func.func @transform_2(%arg0: i32, %arg1: i32) -> (i32, i32) {
    %c0_i32 = arith.constant 0 : i32
    %c0_i32_0 = arith.constant 0 : i32
    %c0_i32_1 = arith.constant 0 : i32
    return %c0_i32, %c0_i32_0 : i32, i32
  }
  func.func @transform_3(%arg0: i32, %arg1: i32) -> (i32, i32) {
    %c0_i32 = arith.constant 0 : i32
    %c0_i32_0 = arith.constant 0 : i32
    return %arg0, %c0_i32 : i32, i32
  }
}

</mosaic_0001>

<llo_original>
// kernel: gcn_forward.6
$region0: #{gcn_forward.6}
  #allocation0 [shape = 'u32[]', space=smem, size = 0x4, offset = 0x4, fixed_abs, tag = 'smem constant byte address 0x4 - core index']
  #allocation1 [shape = 'u32[144,128]{1,0:T(1,128)}', space=vmem, size = 0x12000, scoped, tag = 'internal scratch']
  %s0 = inlined_call_operand.vmem [shape: bf16[256,128], index: 0, kind: input, shape index: {}]
  %s1 = inlined_call_operand.vmem [shape: bf16[128,128], index: 1, kind: input, shape index: {}]
  %s2 = inlined_call_operand.vmem [shape: bf16[256,128], index: 2, kind: output, shape index: {}]
  %s3 = sld [smem:[#allocation0]]
  $region41: #{gcn_forward.6} parent=0
    _
  %s5 = ssub.s32 1, %s3
  %s6 = scalar_select 0, %s5, %s3
  loop: start=0, step=1, limit=4
  $region2: #{gcn_forward.6} parent=0 // loop_pre_header
    _
  $region3: #{gcn_forward.6} parent=0 // loop_header
    %s8 = sphi 0, %s12
    %p9 = scmp.ge.s32.totalorder %s8, 4
    %s18 = sphi 0, %s20
    %s21 = sphi 0, %s18
    %s22 = sphi 0, %s21
    %s38 = sphi 0, %s22
    %s42 = sphi 0, %s42
    %s44 = sphi 0, %s42
    %s45 = sphi 0, %s44
    %s59 = sphi 0, %s45
    %s65 = sphi 0, %s67
    %s68 = sphi 0, %s65
    %s69 = sphi 0, %s68
    %s85 = sphi 0, %s69
  $region4: #{gcn_forward.6} parent=0 // loop_header_branch
    %11 = sbr.rel (%p9) target = $region8
  $region5: #{gcn_forward.6} parent=0 // loop_body
    %s13 = ssub.s32 %s8, 1
    %s14 = ssub.s32 %s8, 2
    %s15 = sadd.s32 %s8, 1
    %s16 = ssub.s32 %s8, %s15
    %p17 = scmp.eq.s32.totalorder %s16, 0
    %s19 = sadd.s32 %s18, 1
    %s20 = scalar_select %p17, %s18, %s19
    %p23 = pneg %p17
    %p24 = scmp.eq.s32.totalorder %s8, 1
    %p25 = por %p23, %p24
    %p26 = scmp.ne.s32.totalorder %s18, %s21
    %p27 = scmp.eq.s32.totalorder %s8, 0
    %p28 = por %p26, %p27
    %p29 = scmp.ne.s32.totalorder %s18, %s21
    %p30 = scmp.eq.s32.totalorder %s13, 1
    %p31 = por %p29, %p30
    %p32 = scmp.ne.s32.totalorder %s21, %s22
    %p33 = scmp.eq.s32.totalorder %s13, 0
    %p34 = por %p32, %p33
    %p35 = scmp.ne.s32.totalorder %s21, %s22
    %p36 = scmp.eq.s32.totalorder %s14, 1
    %p37 = por %p35, %p36
    %p39 = scmp.ne.s32.totalorder %s22, %s38
    %p40 = scmp.eq.s32.totalorder %s14, 0
    %p41 = por %p39, %p40
    %s43 = sadd.s32 %s42, 1
    %p46 = scmp.eq.s32.totalorder %s8, 1
    %p47 = scmp.ne.s32.totalorder %s42, %s44
    %p48 = scmp.eq.s32.totalorder %s8, 0
    %p49 = por %p47, %p48
    %p50 = scmp.ne.s32.totalorder %s42, %s44
    %p51 = scmp.eq.s32.totalorder %s13, 1
    %p52 = por %p50, %p51
    %p53 = scmp.ne.s32.totalorder %s44, %s45
    %p54 = scmp.eq.s32.totalorder %s13, 0
    %p55 = por %p53, %p54
    %p56 = scmp.ne.s32.totalorder %s44, %s45
    %p57 = scmp.eq.s32.totalorder %s14, 1
    %p58 = por %p56, %p57
    %p60 = scmp.ne.s32.totalorder %s45, %s59
    %p61 = scmp.eq.s32.totalorder %s14, 0
    %p62 = por %p60, %p61
    %s63 = ssub.s32 %s8, %s15
    %p64 = scmp.eq.s32.totalorder %s63, 0
    %s66 = sadd.s32 %s65, 1
    %s67 = scalar_select %p64, %s65, %s66
    %p70 = pneg %p64
    %p71 = scmp.eq.s32.totalorder %s8, 1
    %p72 = por %p70, %p71
    %p73 = scmp.ne.s32.totalorder %s65, %s68
    %p74 = scmp.eq.s32.totalorder %s8, 0
    %p75 = por %p73, %p74
    %p76 = scmp.ne.s32.totalorder %s65, %s68
    %p77 = scmp.eq.s32.totalorder %s13, 1
    %p78 = por %p76, %p77
    %p79 = scmp.ne.s32.totalorder %s68, %s69
    %p80 = scmp.eq.s32.totalorder %s13, 0
    %p81 = por %p79, %p80
    %p82 = scmp.ne.s32.totalorder %s68, %s69
    %p83 = scmp.eq.s32.totalorder %s14, 1
    %p84 = por %p82, %p83
    %p86 = scmp.ne.s32.totalorder %s69, %s85
    %p87 = scmp.eq.s32.totalorder %s14, 0
    %p88 = por %p86, %p87
    %p89 = scmp.le.s32.totalorder 1, %s8
    %p90 = scmp.lt.s32.totalorder %s8, 3
    %p91 = pnand %p89, %p90
    %p92 = pneg %p91
    // Predicated region
    $region9: #{gcn_forward.6} parent=5 // pred_check
      _
    $region10: #{gcn_forward.6} parent=5 // pred_check_branch
      %94 = sbr.rel (%p91) target = $region12
    $region11: #{gcn_forward.6} parent=5 // pred_region
      %s95 = ssub.s32 %s8, 1
      // Predicated region
      $region13: #{gcn_forward.6} parent=11 // pred_check
        %p96 = pneg %p55
      $region14: #{gcn_forward.6} parent=11 // pred_check_branch
        %98 = sbr.rel (%p96) target = $region16
      $region15: #{gcn_forward.6} parent=11 // pred_region
        _
      $region16: #{gcn_forward.6} parent=11 // pred_fallthru
        _
    $region12: #{gcn_forward.6} parent=5 // pred_fallthru
      _
    %p99 = scmp.lt.s32.totalorder %s8, 2
    // Predicated region
    $region17: #{gcn_forward.6} parent=5 // pred_check
      %p100 = pneg %p99
    $region18: #{gcn_forward.6} parent=5 // pred_check_branch
      %102 = sbr.rel (%p100) target = $region20
    $region19: #{gcn_forward.6} parent=5 // pred_region
      // Predicated region
      $region21: #{gcn_forward.6} parent=19 // pred_check
        %p103 = pneg %p28
      $region22: #{gcn_forward.6} parent=19 // pred_check_branch
        %105 = sbr.rel (%p103) target = $region24
      $region23: #{gcn_forward.6} parent=19 // pred_region
        %s106 = smul.u32 16, %s8
        %p107 = scmp.lt.s32.totalorder %s106, 31
        %s108 = scalar_select %p107, %s106, 31
        %s109 = smul.addr %s108, 4
        %s110 = scalar_lea.vmem %s0, %s109
        %s111 = smul.u32 16, %s8
      $region24: #{gcn_forward.6} parent=19 // pred_fallthru
        _
    $region20: #{gcn_forward.6} parent=5 // pred_fallthru
      _
    %p112 = scmp.le.s32.totalorder 1, %s8
    %p113 = scmp.lt.s32.totalorder %s8, 3
    %p114 = pnand %p112, %p113
    %p115 = pneg %p114
    // Predicated region
    $region25: #{gcn_forward.6} parent=5 // pred_check
      _
    $region26: #{gcn_forward.6} parent=5 // pred_check_branch
      %117 = sbr.rel (%p114) target = $region28
    $region27: #{gcn_forward.6} parent=5 // pred_region
      %s118 = ssub.s32 %s8, 1
      %s119 = smul.u32 16, %s13
      %p120 = scmp.lt.s32.totalorder %s119, 31
      %s121 = scalar_select %p120, %s119, 31
      %s122 = smul.addr %s121, 4
      %s123 = scalar_lea.vmem %s0, %s122
      %p124 = pneg %p34
      %p125 = pneg %p31
      %p126 = pneg %p55
      %p127 = pneg %p52
      %p128 = pneg %p81
      %p129 = pneg %p78
      %s130 = smul.u32 16, %s13
      %p131 = scmp.lt.s32.totalorder %s130, 31
      %s132 = scalar_select %p131, %s130, 31
      %s133 = smul.addr %s132, 4
      %s134 = scalar_lea.vmem %s2, %s133
      %s135 = smul.u32 16, %s13
      %p136 = scmp.lt.s32.totalorder %s135, 31
      %s137 = scalar_select %p136, %s135, 31
      %s138 = smul.addr %s137, 4
      %s139 = scalar_lea.vmem %s0, %s138
      %s140 = smul.u32 16, %s13
      %s141 = smul.u32 16, %s13
      %p142 = scmp.lt.s32.totalorder %s141, 31
      %s143 = scalar_select %p142, %s141, 31
      %s144 = smul.addr %s143, 4
      %s145 = scalar_lea.vmem %s2, %s144
      %s146 = smul.u32 16, %s13
      %v148 = vld [vmem:[%s139] sm:$0xf]
      %v149 = vld [vmem:[%s139 + $0x4] sm:$0xf]
      %v150 = vld [vmem:[%s139 + $0x8] sm:$0xf]
      %v151 = vld [vmem:[%s139 + $0xc] sm:$0xf]
      %v152 = vld [vmem:[%s139 + $0x10] sm:$0xf]
      %v153 = vld [vmem:[%s139 + $0x14] sm:$0xf]
      %v154 = vld [vmem:[%s139 + $0x18] sm:$0xf]
      %v155 = vld [vmem:[%s139 + $0x1c] sm:$0xf]
      %v156 = vld [vmem:[%s139 + $0x20] sm:$0xf]
      %v157 = vld [vmem:[%s139 + $0x24] sm:$0xf]
      %v158 = vld [vmem:[%s139 + $0x28] sm:$0xf]
      %v159 = vld [vmem:[%s139 + $0x2c] sm:$0xf]
      %v160 = vld [vmem:[%s139 + $0x30] sm:$0xf]
      %v161 = vld [vmem:[%s139 + $0x34] sm:$0xf]
      %v162 = vld [vmem:[%s139 + $0x38] sm:$0xf]
      %v163 = vld [vmem:[%s139 + $0x3c] sm:$0xf]
      %v164 = vld [vmem:[%s1] sm:$0xf]
      %v165 = vld [vmem:[%s1 + $0x4] sm:$0xf]
      %v166 = vld [vmem:[%s1 + $0x8] sm:$0xf]
      %v167 = vld [vmem:[%s1 + $0xc] sm:$0xf]
      %v168 = vld [vmem:[%s1 + $0x10] sm:$0xf]
      %v169 = vld [vmem:[%s1 + $0x14] sm:$0xf]
      %v170 = vld [vmem:[%s1 + $0x18] sm:$0xf]
      %v171 = vld [vmem:[%s1 + $0x1c] sm:$0xf]
      %v172 = vld [vmem:[%s1 + $0x20] sm:$0xf]
      %v173 = vld [vmem:[%s1 + $0x24] sm:$0xf]
      %v174 = vld [vmem:[%s1 + $0x28] sm:$0xf]
      %v175 = vld [vmem:[%s1 + $0x2c] sm:$0xf]
      %v176 = vld [vmem:[%s1 + $0x30] sm:$0xf]
      %v177 = vld [vmem:[%s1 + $0x34] sm:$0xf]
      %v178 = vld [vmem:[%s1 + $0x38] sm:$0xf]
      %v179 = vld [vmem:[%s1 + $0x3c] sm:$0xf]
      %v196 = vunpack.c.l.b16 %v148
      %v197 = vunpack.c.l.b16 %v149
      %v198 = vunpack.c.l.b16 %v150
      %v199 = vunpack.c.l.b16 %v151
      %v200 = vunpack.c.l.b16 %v152
      %v201 = vunpack.c.l.b16 %v153
      %v202 = vunpack.c.l.b16 %v154
      %v203 = vunpack.c.l.b16 %v155
      %v204 = vunpack.c.l.b16 %v156
      %v205 = vunpack.c.l.b16 %v157
      %v206 = vunpack.c.l.b16 %v158
      %v207 = vunpack.c.l.b16 %v159
      %v208 = vunpack.c.l.b16 %v160
      %v209 = vunpack.c.l.b16 %v161
      %v210 = vunpack.c.l.b16 %v162
      %v211 = vunpack.c.l.b16 %v163
      %v212 = vpack.c.b16 %v197, %v196
      %v213 = vpack.c.b16 %v199, %v198
      %v214 = vpack.c.b16 %v201, %v200
      %v215 = vpack.c.b16 %v203, %v202
      %v216 = vpack.c.b16 %v205, %v204
      %v217 = vpack.c.b16 %v207, %v206
      %v218 = vpack.c.b16 %v209, %v208
      %v219 = vpack.c.b16 %v211, %v210
      %v244 = vunpack.c.l.b16 %v164
      %v245 = vunpack.c.l.b16 %v165
      %v246 = vunpack.c.l.b16 %v166
      %v247 = vunpack.c.l.b16 %v167
      %v248 = vunpack.c.l.b16 %v168
      %v249 = vunpack.c.l.b16 %v169
      %v250 = vunpack.c.l.b16 %v170
      %v251 = vunpack.c.l.b16 %v171
      %v252 = vunpack.c.l.b16 %v172
      %v253 = vunpack.c.l.b16 %v173
      %v254 = vunpack.c.l.b16 %v174
      %v255 = vunpack.c.l.b16 %v175
      %v256 = vunpack.c.l.b16 %v176
      %v257 = vunpack.c.l.b16 %v177
      %v258 = vunpack.c.l.b16 %v178
      %v259 = vunpack.c.l.b16 %v179
      %v260 = vpack.c.b16 %v245, %v244
      %v261 = vpack.c.b16 %v247, %v246
      %v262 = vpack.c.b16 %v249, %v248
      %v263 = vpack.c.b16 %v251, %v250
      %v264 = vpack.c.b16 %v253, %v252
      %v265 = vpack.c.b16 %v255, %v254
      %v266 = vpack.c.b16 %v257, %v256
      %v267 = vpack.c.b16 %v259, %v258
      %276 = vmatprep.subr.bf16.mxu0 0
      %277 = vmatpush1.bf16.msra.mxu0 %v260
      %278 = vmatprep.subr.bf16.mxu0 0
      %279 = vmatpush1.bf16.msra.mxu0 %v261
      %280 = vmatprep.subr.bf16.mxu0 0
      %281 = vmatpush1.bf16.msra.mxu0 %v262
      %282 = vmatprep.subr.bf16.mxu0 0
      %283 = vmatpush1.bf16.msra.mxu0 %v263
      %284 = vmatprep.subr.bf16.mxu0 0
      %285 = vmatpush1.bf16.msra.mxu0 %v264
      %286 = vmatprep.subr.bf16.mxu0 0
      %287 = vmatpush1.bf16.msra.mxu0 %v265
      %288 = vmatprep.subr.bf16.mxu0 0
      %289 = vmatpush1.bf16.msra.mxu0 %v266
      %290 = vmatprep.subr.bf16.mxu0 0
      %291 = vmatpush1.bf16.msra.mxu0 %v267
      %292 = vmatprep.subr.bf16.mxu0 0
      %293 = vmatpush1.bf16.msra.mxu0 0
      %294 = vmatprep.subr.bf16.mxu0 0
      %295 = vmatpush1.bf16.msra.mxu0 0
      %296 = vmatprep.subr.bf16.mxu0 0
      %297 = vmatpush1.bf16.msra.mxu0 0
      %298 = vmatprep.subr.bf16.mxu0 0
      %299 = vmatpush1.bf16.msra.mxu0 0
      %300 = vmatprep.subr.bf16.mxu0 0
      %301 = vmatpush1.bf16.msra.mxu0 0
      %302 = vmatprep.subr.bf16.mxu0 0
      %303 = vmatpush1.bf16.msra.mxu0 0
      %304 = vmatprep.subr.bf16.mxu0 0
      %305 = vmatpush1.bf16.msra.mxu0 0
      %306 = vmatprep.subr.bf16.mxu0 0
      %307 = vmatpush1.bf16.msra.mxu0 0
      %308 = vmatprep.mubr.bf16.mxu0 0
      %309 = vmatmul.mubr.bf16.gmra.mrb[0].mxu0 %v212
      %v310 = vpop.f32.mrb[0].mxu0
      %v311 = vadd.f32 0.0, %v310
      %v312 = vpop.f32.mrb[0].mxu0
      %v313 = vpop.f32.mrb[0].mxu0
      %v314 = vadd.f32 0.0, %v313
      %v315 = vpop.f32.mrb[0].mxu0
      %316 = vmatprep.mubr.bf16.mxu0 0
      %317 = vmatmul.mubr.bf16.gmra.mrb[0].mxu0 %v213
      %v318 = vpop.f32.mrb[0].mxu0
      %v319 = vadd.f32 0.0, %v318
      %v320 = vpop.f32.mrb[0].mxu0
      %v321 = vpop.f32.mrb[0].mxu0
      %v322 = vadd.f32 0.0, %v321
      %v323 = vpop.f32.mrb[0].mxu0
      %324 = vmatprep.mubr.bf16.mxu0 0
      %325 = vmatmul.mubr.bf16.gmra.mrb[0].mxu0 %v214
      %v326 = vpop.f32.mrb[0].mxu0
      %v327 = vadd.f32 0.0, %v326
      %v328 = vpop.f32.mrb[0].mxu0
      %v329 = vpop.f32.mrb[0].mxu0
      %v330 = vadd.f32 0.0, %v329
      %v331 = vpop.f32.mrb[0].mxu0
      %332 = vmatprep.mubr.bf16.mxu0 0
      %333 = vmatmul.mubr.bf16.gmra.mrb[0].mxu0 %v215
      %v334 = vpop.f32.mrb[0].mxu0
      %v335 = vadd.f32 0.0, %v334
      %v336 = vpop.f32.mrb[0].mxu0
      %v337 = vpop.f32.mrb[0].mxu0
      %v338 = vadd.f32 0.0, %v337
      %v339 = vpop.f32.mrb[0].mxu0
      %340 = vmatprep.mubr.bf16.mxu0 0
      %341 = vmatmul.mubr.bf16.gmra.mrb[0].mxu0 %v216
      %v342 = vpop.f32.mrb[0].mxu0
      %v343 = vadd.f32 0.0, %v342
      %v344 = vpop.f32.mrb[0].mxu0
      %v345 = vpop.f32.mrb[0].mxu0
      %v346 = vadd.f32 0.0, %v345
      %v347 = vpop.f32.mrb[0].mxu0
      %348 = vmatprep.mubr.bf16.mxu0 0
      %349 = vmatmul.mubr.bf16.gmra.mrb[0].mxu0 %v217
      %v350 = vpop.f32.mrb[0].mxu0
      %v351 = vadd.f32 0.0, %v350
      %v352 = vpop.f32.mrb[0].mxu0
      %v353 = vpop.f32.mrb[0].mxu0
      %v354 = vadd.f32 0.0, %v353
      %v355 = vpop.f32.mrb[0].mxu0
      %356 = vmatprep.mubr.bf16.mxu0 0
      %357 = vmatmul.mubr.bf16.gmra.mrb[0].mxu0 %v218
      %v358 = vpop.f32.mrb[0].mxu0
      %v359 = vadd.f32 0.0, %v358
      %v360 = vpop.f32.mrb[0].mxu0
      %v361 = vpop.f32.mrb[0].mxu0
      %v362 = vadd.f32 0.0, %v361
      %v363 = vpop.f32.mrb[0].mxu0
      %364 = vmatprep.mubr.bf16.mxu0 0
      %365 = vmatmul.mubr.bf16.gmra.mrb[0].mxu0 %v219
      %v366 = vpop.f32.mrb[0].mxu0
      %v367 = vadd.f32 0.0, %v366
      %v368 = vpop.f32.mrb[0].mxu0
      %v369 = vpop.f32.mrb[0].mxu0
      %v370 = vadd.f32 0.0, %v369
      %v371 = vpop.f32.mrb[0].mxu0
      %372 = vdwg.mxu0
      %v373 = vpack.c.bf16 %v314, %v311
      %v374 = vpack.c.bf16 %v322, %v319
      %v375 = vpack.c.bf16 %v330, %v327
      %v376 = vpack.c.bf16 %v338, %v335
      %v377 = vpack.c.bf16 %v346, %v343
      %v378 = vpack.c.bf16 %v354, %v351
      %v379 = vpack.c.bf16 %v362, %v359
      %v380 = vpack.c.bf16 %v370, %v367
      %v389 = vunpack.c.l.b16 %v373
      %v390 = vunpack.c.h.b16 %v373
      %v391 = vunpack.c.l.b16 %v374
      %v392 = vunpack.c.h.b16 %v374
      %v393 = vunpack.c.l.b16 %v375
      %v394 = vunpack.c.h.b16 %v375
      %v395 = vunpack.c.l.b16 %v376
      %v396 = vunpack.c.h.b16 %v376
      %v397 = vunpack.c.l.b16 %v377
      %v398 = vunpack.c.h.b16 %v377
      %v399 = vunpack.c.l.b16 %v378
      %v400 = vunpack.c.h.b16 %v378
      %v401 = vunpack.c.l.b16 %v379
      %v402 = vunpack.c.h.b16 %v379
      %v403 = vunpack.c.l.b16 %v380
      %v404 = vunpack.c.h.b16 %v380
      %v405 = vpack.c.b16 %v389, %v389
      %v406 = vpack.c.b16 %v390, %v390
      %v407 = vpack.c.b16 %v391, %v391
      %v408 = vpack.c.b16 %v392, %v392
      %v409 = vpack.c.b16 %v393, %v393
      %v410 = vpack.c.b16 %v394, %v394
      %v411 = vpack.c.b16 %v395, %v395
      %v412 = vpack.c.b16 %v396, %v396
      %v413 = vpack.c.b16 %v397, %v397
      %v414 = vpack.c.b16 %v398, %v398
      %v415 = vpack.c.b16 %v399, %v399
      %v416 = vpack.c.b16 %v400, %v400
      %v417 = vpack.c.b16 %v401, %v401
      %v418 = vpack.c.b16 %v402, %v402
      %v419 = vpack.c.b16 %v403, %v403
      %v420 = vpack.c.b16 %v404, %v404
      %437 = vst [vmem:[%s145] sm:$0xf] %v405
      %438 = vst [vmem:[%s145 + $0x4] sm:$0xf] %v406
      %439 = vst [vmem:[%s145 + $0x8] sm:$0xf] %v407
      %440 = vst [vmem:[%s145 + $0xc] sm:$0xf] %v408
      %441 = vst [vmem:[%s145 + $0x10] sm:$0xf] %v409
      %442 = vst [vmem:[%s145 + $0x14] sm:$0xf] %v410
      %443 = vst [vmem:[%s145 + $0x18] sm:$0xf] %v411
      %444 = vst [vmem:[%s145 + $0x1c] sm:$0xf] %v412
      %445 = vst [vmem:[%s145 + $0x20] sm:$0xf] %v413
      %446 = vst [vmem:[%s145 + $0x24] sm:$0xf] %v414
      %447 = vst [vmem:[%s145 + $0x28] sm:$0xf] %v415
      %448 = vst [vmem:[%s145 + $0x2c] sm:$0xf] %v416
      %449 = vst [vmem:[%s145 + $0x30] sm:$0xf] %v417
      %450 = vst [vmem:[%s145 + $0x34] sm:$0xf] %v418
      %451 = vst [vmem:[%s145 + $0x38] sm:$0xf] %v419
      %452 = vst [vmem:[%s145 + $0x3c] sm:$0xf] %v420
      %s453 = smul.u32 16, %s13
      %p454 = scmp.lt.s32.totalorder %s453, 31
      %s455 = scalar_select %p454, %s453, 31
      %s456 = smul.addr %s455, 4
      %s457 = scalar_lea.vmem %s2, %s456
      // Predicated region
      $region29: #{gcn_forward.6} parent=27 // pred_check
        %p458 = pneg %p78
      $region30: #{gcn_forward.6} parent=27 // pred_check_branch
        %460 = sbr.rel (%p458) target = $region32
      $region31: #{gcn_forward.6} parent=27 // pred_region
        %s461 = smul.u32 16, %s13
      $region32: #{gcn_forward.6} parent=27 // pred_fallthru
        _
    $region28: #{gcn_forward.6} parent=5 // pred_fallthru
      _
    %p462 = scmp.le.s32.totalorder 2, %s8
    // Predicated region
    $region33: #{gcn_forward.6} parent=5 // pred_check
      %p463 = pneg %p462
    $region34: #{gcn_forward.6} parent=5 // pred_check_branch
      %465 = sbr.rel (%p463) target = $region36
    $region35: #{gcn_forward.6} parent=5 // pred_region
      %s466 = ssub.s32 %s8, 2
      // Predicated region
      $region37: #{gcn_forward.6} parent=35 // pred_check
        %p467 = pneg %p84
      $region38: #{gcn_forward.6} parent=35 // pred_check_branch
        %469 = sbr.rel (%p467) target = $region40
      $region39: #{gcn_forward.6} parent=35 // pred_region
        %s470 = smul.u32 16, %s14
        %p471 = scmp.lt.s32.totalorder %s470, 31
        %s472 = scalar_select %p471, %s470, 31
        %s473 = smul.addr %s472, 4
        %s474 = scalar_lea.vmem %s2, %s473
      $region40: #{gcn_forward.6} parent=35 // pred_fallthru
        _
    $region36: #{gcn_forward.6} parent=5 // pred_fallthru
      _
  $region6: #{gcn_forward.6} parent=0 // loop_footer
    %s12 = sadd.s32 1, %s8
  $region7: #{gcn_forward.6} parent=0 // loop_footer_branch
    %7 = sbr.rel target = $region3
  $region8: #{gcn_forward.6} parent=0 // loop_exit
    _

// kernel: gcn_forward.4
$region0: #{gcn_forward.4}
  #allocation0 [shape = 'u32[]', space=smem, size = 0x4, offset = 0x4, fixed_abs, tag = 'smem constant byte address 0x4 - core index']
  #allocation1 [shape = 'u32[144,128]{1,0:T(1,128)}', space=vmem, size = 0x12000, scoped, tag = 'internal scratch']
  %s0 = inlined_call_operand.vmem [shape: bf16[256,16], index: 0, kind: input, shape index: {}]
  %s1 = inlined_call_operand.vmem [shape: bf16[16,128], index: 1, kind: input, shape index: {}]
  %s2 = inlined_call_operand.vmem [shape: bf16[256,128], index: 2, kind: output, shape index: {}]
  %s3 = sld [smem:[#allocation0]]
  $region41: #{gcn_forward.4} parent=0
    _
  %s5 = ssub.s32 1, %s3
  %s6 = scalar_select 0, %s5, %s3
  loop: start=0, step=1, limit=4
  $region2: #{gcn_forward.4} parent=0 // loop_pre_header
    _
  $region3: #{gcn_forward.4} parent=0 // loop_header
    %s8 = sphi 0, %s12
    %p9 = scmp.ge.s32.totalorder %s8, 4
    %s18 = sphi 0, %s20
    %s21 = sphi 0, %s18
    %s22 = sphi 0, %s21
    %s38 = sphi 0, %s22
    %s42 = sphi 0, %s42
    %s44 = sphi 0, %s42
    %s45 = sphi 0, %s44
    %s59 = sphi 0, %s45
    %s65 = sphi 0, %s67
    %s68 = sphi 0, %s65
    %s69 = sphi 0, %s68
    %s85 = sphi 0, %s69
  $region4: #{gcn_forward.4} parent=0 // loop_header_branch
    %11 = sbr.rel (%p9) target = $region8
  $region5: #{gcn_forward.4} parent=0 // loop_body
    %s13 = ssub.s32 %s8, 1
    %s14 = ssub.s32 %s8, 2
    %s15 = sadd.s32 %s8, 1
    %s16 = ssub.s32 %s8, %s15
    %p17 = scmp.eq.s32.totalorder %s16, 0
    %s19 = sadd.s32 %s18, 1
    %s20 = scalar_select %p17, %s18, %s19
    %p23 = pneg %p17
    %p24 = scmp.eq.s32.totalorder %s8, 1
    %p25 = por %p23, %p24
    %p26 = scmp.ne.s32.totalorder %s18, %s21
    %p27 = scmp.eq.s32.totalorder %s8, 0
    %p28 = por %p26, %p27
    %p29 = scmp.ne.s32.totalorder %s18, %s21
    %p30 = scmp.eq.s32.totalorder %s13, 1
    %p31 = por %p29, %p30
    %p32 = scmp.ne.s32.totalorder %s21, %s22
    %p33 = scmp.eq.s32.totalorder %s13, 0
    %p34 = por %p32, %p33
    %p35 = scmp.ne.s32.totalorder %s21, %s22
    %p36 = scmp.eq.s32.totalorder %s14, 1
    %p37 = por %p35, %p36
    %p39 = scmp.ne.s32.totalorder %s22, %s38
    %p40 = scmp.eq.s32.totalorder %s14, 0
    %p41 = por %p39, %p40
    %s43 = sadd.s32 %s42, 1
    %p46 = scmp.eq.s32.totalorder %s8, 1
    %p47 = scmp.ne.s32.totalorder %s42, %s44
    %p48 = scmp.eq.s32.totalorder %s8, 0
    %p49 = por %p47, %p48
    %p50 = scmp.ne.s32.totalorder %s42, %s44
    %p51 = scmp.eq.s32.totalorder %s13, 1
    %p52 = por %p50, %p51
    %p53 = scmp.ne.s32.totalorder %s44, %s45
    %p54 = scmp.eq.s32.totalorder %s13, 0
    %p55 = por %p53, %p54
    %p56 = scmp.ne.s32.totalorder %s44, %s45
    %p57 = scmp.eq.s32.totalorder %s14, 1
    %p58 = por %p56, %p57
    %p60 = scmp.ne.s32.totalorder %s45, %s59
    %p61 = scmp.eq.s32.totalorder %s14, 0
    %p62 = por %p60, %p61
    %s63 = ssub.s32 %s8, %s15
    %p64 = scmp.eq.s32.totalorder %s63, 0
    %s66 = sadd.s32 %s65, 1
    %s67 = scalar_select %p64, %s65, %s66
    %p70 = pneg %p64
    %p71 = scmp.eq.s32.totalorder %s8, 1
    %p72 = por %p70, %p71
    %p73 = scmp.ne.s32.totalorder %s65, %s68
    %p74 = scmp.eq.s32.totalorder %s8, 0
    %p75 = por %p73, %p74
    %p76 = scmp.ne.s32.totalorder %s65, %s68
    %p77 = scmp.eq.s32.totalorder %s13, 1
    %p78 = por %p76, %p77
    %p79 = scmp.ne.s32.totalorder %s68, %s69
    %p80 = scmp.eq.s32.totalorder %s13, 0
    %p81 = por %p79, %p80
    %p82 = scmp.ne.s32.totalorder %s68, %s69
    %p83 = scmp.eq.s32.totalorder %s14, 1
    %p84 = por %p82, %p83
    %p86 = scmp.ne.s32.totalorder %s69, %s85
    %p87 = scmp.eq.s32.totalorder %s14, 0
    %p88 = por %p86, %p87
    %p89 = scmp.le.s32.totalorder 1, %s8
    %p90 = scmp.lt.s32.totalorder %s8, 3
    %p91 = pnand %p89, %p90
    %p92 = pneg %p91
    // Predicated region
    $region9: #{gcn_forward.4} parent=5 // pred_check
      _
    $region10: #{gcn_forward.4} parent=5 // pred_check_branch
      %94 = sbr.rel (%p91) target = $region12
    $region11: #{gcn_forward.4} parent=5 // pred_region
      %s95 = ssub.s32 %s8, 1
      // Predicated region
      $region13: #{gcn_forward.4} parent=11 // pred_check
        %p96 = pneg %p55
      $region14: #{gcn_forward.4} parent=11 // pred_check_branch
        %98 = sbr.rel (%p96) target = $region16
      $region15: #{gcn_forward.4} parent=11 // pred_region
        _
      $region16: #{gcn_forward.4} parent=11 // pred_fallthru
        _
    $region12: #{gcn_forward.4} parent=5 // pred_fallthru
      _
    %p99 = scmp.lt.s32.totalorder %s8, 2
    // Predicated region
    $region17: #{gcn_forward.4} parent=5 // pred_check
      %p100 = pneg %p99
    $region18: #{gcn_forward.4} parent=5 // pred_check_branch
      %102 = sbr.rel (%p100) target = $region20
    $region19: #{gcn_forward.4} parent=5 // pred_region
      // Predicated region
      $region21: #{gcn_forward.4} parent=19 // pred_check
        %p103 = pneg %p28
      $region22: #{gcn_forward.4} parent=19 // pred_check_branch
        %105 = sbr.rel (%p103) target = $region24
      $region23: #{gcn_forward.4} parent=19 // pred_region
        %s106 = smul.u32 16, %s8
        %p107 = scmp.lt.s32.totalorder %s106, 31
        %s108 = scalar_select %p107, %s106, 31
        %s109 = smul.addr %s108, 4
        %s110 = scalar_lea.vmem %s0, %s109
        %s111 = smul.u32 16, %s8
      $region24: #{gcn_forward.4} parent=19 // pred_fallthru
        _
    $region20: #{gcn_forward.4} parent=5 // pred_fallthru
      _
    %p112 = scmp.le.s32.totalorder 1, %s8
    %p113 = scmp.lt.s32.totalorder %s8, 3
    %p114 = pnand %p112, %p113
    %p115 = pneg %p114
    // Predicated region
    $region25: #{gcn_forward.4} parent=5 // pred_check
      _
    $region26: #{gcn_forward.4} parent=5 // pred_check_branch
      %117 = sbr.rel (%p114) target = $region28
    $region27: #{gcn_forward.4} parent=5 // pred_region
      %s118 = ssub.s32 %s8, 1
      %s119 = smul.u32 16, %s13
      %p120 = scmp.lt.s32.totalorder %s119, 31
      %s121 = scalar_select %p120, %s119, 31
      %s122 = smul.addr %s121, 4
      %s123 = scalar_lea.vmem %s0, %s122
      %p124 = pneg %p34
      %p125 = pneg %p31
      %p126 = pneg %p55
      %p127 = pneg %p52
      %p128 = pneg %p81
      %p129 = pneg %p78
      %s130 = smul.u32 16, %s13
      %p131 = scmp.lt.s32.totalorder %s130, 31
      %s132 = scalar_select %p131, %s130, 31
      %s133 = smul.addr %s132, 4
      %s134 = scalar_lea.vmem %s2, %s133
      %s135 = smul.u32 16, %s13
      %p136 = scmp.lt.s32.totalorder %s135, 31
      %s137 = scalar_select %p136, %s135, 31
      %s138 = smul.addr %s137, 4
      %s139 = scalar_lea.vmem %s0, %s138
      %s140 = smul.u32 16, %s13
      %s141 = smul.u32 16, %s13
      %p142 = scmp.lt.s32.totalorder %s141, 31
      %s143 = scalar_select %p142, %s141, 31
      %s144 = smul.addr %s143, 4
      %s145 = scalar_lea.vmem %s2, %s144
      %s146 = smul.u32 16, %s13
      %v148 = vld [vmem:[%s139] sm:$0xf]
      %v149 = vld [vmem:[%s139 + $0x4] sm:$0xf]
      %v150 = vld [vmem:[%s139 + $0x8] sm:$0xf]
      %v151 = vld [vmem:[%s139 + $0xc] sm:$0xf]
      %v152 = vld [vmem:[%s139 + $0x10] sm:$0xf]
      %v153 = vld [vmem:[%s139 + $0x14] sm:$0xf]
      %v154 = vld [vmem:[%s139 + $0x18] sm:$0xf]
      %v155 = vld [vmem:[%s139 + $0x1c] sm:$0xf]
      %v156 = vld [vmem:[%s139 + $0x20] sm:$0xf]
      %v157 = vld [vmem:[%s139 + $0x24] sm:$0xf]
      %v158 = vld [vmem:[%s139 + $0x28] sm:$0xf]
      %v159 = vld [vmem:[%s139 + $0x2c] sm:$0xf]
      %v160 = vld [vmem:[%s139 + $0x30] sm:$0xf]
      %v161 = vld [vmem:[%s139 + $0x34] sm:$0xf]
      %v162 = vld [vmem:[%s139 + $0x38] sm:$0xf]
      %v163 = vld [vmem:[%s139 + $0x3c] sm:$0xf]
      %v164 = vld [vmem:[%s1] sm:$0xf]
      %v165 = vld [vmem:[%s1 + $0x4] sm:$0xf]
      %v182 = vunpack.c.l.b16 %v148
      %v183 = vunpack.c.l.b16 %v149
      %v184 = vunpack.c.l.b16 %v150
      %v185 = vunpack.c.l.b16 %v151
      %v186 = vunpack.c.l.b16 %v152
      %v187 = vunpack.c.l.b16 %v153
      %v188 = vunpack.c.l.b16 %v154
      %v189 = vunpack.c.l.b16 %v155
      %v190 = vunpack.c.l.b16 %v156
      %v191 = vunpack.c.l.b16 %v157
      %v192 = vunpack.c.l.b16 %v158
      %v193 = vunpack.c.l.b16 %v159
      %v194 = vunpack.c.l.b16 %v160
      %v195 = vunpack.c.l.b16 %v161
      %v196 = vunpack.c.l.b16 %v162
      %v197 = vunpack.c.l.b16 %v163
      %v198 = vpack.c.b16 %v183, %v182
      %v199 = vpack.c.b16 %v185, %v184
      %v200 = vpack.c.b16 %v187, %v186
      %v201 = vpack.c.b16 %v189, %v188
      %v202 = vpack.c.b16 %v191, %v190
      %v203 = vpack.c.b16 %v193, %v192
      %v204 = vpack.c.b16 %v195, %v194
      %v205 = vpack.c.b16 %v197, %v196
      %v208 = vunpack.c.l.b16 %v164
      %v209 = vunpack.c.l.b16 %v165
      %v210 = vpack.c.b16 %v209, %v208
      %vm212 = vcmask 130048
      %v214 = vsel %vm212, %v198, 0
      %v217 = vsel %vm212, %v199, 0
      %v220 = vsel %vm212, %v200, 0
      %v223 = vsel %vm212, %v201, 0
      %v226 = vsel %vm212, %v202, 0
      %v229 = vsel %vm212, %v203, 0
      %v232 = vsel %vm212, %v204, 0
      %v235 = vsel %vm212, %v205, 0
      %237 = vmatprep.subr.bf16.mxu0 0
      %238 = vmatpush1.bf16.msra.mxu0 %v210
      %239 = vmatprep.subr.bf16.mxu0 0
      %240 = vmatpush1.bf16.msra.mxu0 0
      %241 = vmatprep.subr.bf16.mxu0 0
      %242 = vmatpush1.bf16.msra.mxu0 0
      %243 = vmatprep.subr.bf16.mxu0 0
      %244 = vmatpush1.bf16.msra.mxu0 0
      %245 = vmatprep.subr.bf16.mxu0 0
      %246 = vmatpush1.bf16.msra.mxu0 0
      %247 = vmatprep.subr.bf16.mxu0 0
      %248 = vmatpush1.bf16.msra.mxu0 0
      %249 = vmatprep.subr.bf16.mxu0 0
      %250 = vmatpush1.bf16.msra.mxu0 0
      %251 = vmatprep.subr.bf16.mxu0 0
      %252 = vmatpush1.bf16.msra.mxu0 0
      %253 = vmatprep.subr.bf16.mxu0 0
      %254 = vmatpush1.bf16.msra.mxu0 0
      %255 = vmatprep.subr.bf16.mxu0 0
      %256 = vmatpush1.bf16.msra.mxu0 0
      %257 = vmatprep.subr.bf16.mxu0 0
      %258 = vmatpush1.bf16.msra.mxu0 0
      %259 = vmatprep.subr.bf16.mxu0 0
      %260 = vmatpush1.bf16.msra.mxu0 0
      %261 = vmatprep.subr.bf16.mxu0 0
      %262 = vmatpush1.bf16.msra.mxu0 0
      %263 = vmatprep.subr.bf16.mxu0 0
      %264 = vmatpush1.bf16.msra.mxu0 0
      %265 = vmatprep.subr.bf16.mxu0 0
      %266 = vmatpush1.bf16.msra.mxu0 0
      %267 = vmatprep.subr.bf16.mxu0 0
      %268 = vmatpush1.bf16.msra.mxu0 0
      %269 = vmatprep.mubr.bf16.mxu0 0
      %270 = vmatmul.mubr.bf16.gmra.mrb[0].mxu0 %v214
      %v271 = vpop.f32.mrb[0].mxu0
      %v272 = vadd.f32 0.0, %v271
      %v273 = vpop.f32.mrb[0].mxu0
      %v274 = vpop.f32.mrb[0].mxu0
      %v275 = vadd.f32 0.0, %v274
      %v276 = vpop.f32.mrb[0].mxu0
      %277 = vmatprep.mubr.bf16.mxu0 0
      %278 = vmatmul.mubr.bf16.gmra.mrb[0].mxu0 %v217
      %v279 = vpop.f32.mrb[0].mxu0
      %v280 = vadd.f32 0.0, %v279
      %v281 = vpop.f32.mrb[0].mxu0
      %v282 = vpop.f32.mrb[0].mxu0
      %v283 = vadd.f32 0.0, %v282
      %v284 = vpop.f32.mrb[0].mxu0
      %285 = vmatprep.mubr.bf16.mxu0 0
      %286 = vmatmul.mubr.bf16.gmra.mrb[0].mxu0 %v220
      %v287 = vpop.f32.mrb[0].mxu0
      %v288 = vadd.f32 0.0, %v287
      %v289 = vpop.f32.mrb[0].mxu0
      %v290 = vpop.f32.mrb[0].mxu0
      %v291 = vadd.f32 0.0, %v290
      %v292 = vpop.f32.mrb[0].mxu0
      %293 = vmatprep.mubr.bf16.mxu0 0
      %294 = vmatmul.mubr.bf16.gmra.mrb[0].mxu0 %v223
      %v295 = vpop.f32.mrb[0].mxu0
      %v296 = vadd.f32 0.0, %v295
      %v297 = vpop.f32.mrb[0].mxu0
      %v298 = vpop.f32.mrb[0].mxu0
      %v299 = vadd.f32 0.0, %v298
      %v300 = vpop.f32.mrb[0].mxu0
      %301 = vmatprep.mubr.bf16.mxu0 0
      %302 = vmatmul.mubr.bf16.gmra.mrb[0].mxu0 %v226
      %v303 = vpop.f32.mrb[0].mxu0
      %v304 = vadd.f32 0.0, %v303
      %v305 = vpop.f32.mrb[0].mxu0
      %v306 = vpop.f32.mrb[0].mxu0
      %v307 = vadd.f32 0.0, %v306
      %v308 = vpop.f32.mrb[0].mxu0
      %309 = vmatprep.mubr.bf16.mxu0 0
      %310 = vmatmul.mubr.bf16.gmra.mrb[0].mxu0 %v229
      %v311 = vpop.f32.mrb[0].mxu0
      %v312 = vadd.f32 0.0, %v311
      %v313 = vpop.f32.mrb[0].mxu0
      %v314 = vpop.f32.mrb[0].mxu0
      %v315 = vadd.f32 0.0, %v314
      %v316 = vpop.f32.mrb[0].mxu0
      %317 = vmatprep.mubr.bf16.mxu0 0
      %318 = vmatmul.mubr.bf16.gmra.mrb[0].mxu0 %v232
      %v319 = vpop.f32.mrb[0].mxu0
      %v320 = vadd.f32 0.0, %v319
      %v321 = vpop.f32.mrb[0].mxu0
      %v322 = vpop.f32.mrb[0].mxu0
      %v323 = vadd.f32 0.0, %v322
      %v324 = vpop.f32.mrb[0].mxu0
      %325 = vmatprep.mubr.bf16.mxu0 0
      %326 = vmatmul.mubr.bf16.gmra.mrb[0].mxu0 %v235
      %v327 = vpop.f32.mrb[0].mxu0
      %v328 = vadd.f32 0.0, %v327
      %v329 = vpop.f32.mrb[0].mxu0
      %v330 = vpop.f32.mrb[0].mxu0
      %v331 = vadd.f32 0.0, %v330
      %v332 = vpop.f32.mrb[0].mxu0
      %333 = vdwg.mxu0
      %v334 = vpack.c.bf16 %v275, %v272
      %v335 = vpack.c.bf16 %v283, %v280
      %v336 = vpack.c.bf16 %v291, %v288
      %v337 = vpack.c.bf16 %v299, %v296
      %v338 = vpack.c.bf16 %v307, %v304
      %v339 = vpack.c.bf16 %v315, %v312
      %v340 = vpack.c.bf16 %v323, %v320
      %v341 = vpack.c.bf16 %v331, %v328
      %v350 = vunpack.c.l.b16 %v334
      %v351 = vunpack.c.h.b16 %v334
      %v352 = vunpack.c.l.b16 %v335
      %v353 = vunpack.c.h.b16 %v335
      %v354 = vunpack.c.l.b16 %v336
      %v355 = vunpack.c.h.b16 %v336
      %v356 = vunpack.c.l.b16 %v337
      %v357 = vunpack.c.h.b16 %v337
      %v358 = vunpack.c.l.b16 %v338
      %v359 = vunpack.c.h.b16 %v338
      %v360 = vunpack.c.l.b16 %v339
      %v361 = vunpack.c.h.b16 %v339
      %v362 = vunpack.c.l.b16 %v340
      %v363 = vunpack.c.h.b16 %v340
      %v364 = vunpack.c.l.b16 %v341
      %v365 = vunpack.c.h.b16 %v341
      %v366 = vpack.c.b16 %v350, %v350
      %v367 = vpack.c.b16 %v351, %v351
      %v368 = vpack.c.b16 %v352, %v352
      %v369 = vpack.c.b16 %v353, %v353
      %v370 = vpack.c.b16 %v354, %v354
      %v371 = vpack.c.b16 %v355, %v355
      %v372 = vpack.c.b16 %v356, %v356
      %v373 = vpack.c.b16 %v357, %v357
      %v374 = vpack.c.b16 %v358, %v358
      %v375 = vpack.c.b16 %v359, %v359
      %v376 = vpack.c.b16 %v360, %v360
      %v377 = vpack.c.b16 %v361, %v361
      %v378 = vpack.c.b16 %v362, %v362
      %v379 = vpack.c.b16 %v363, %v363
      %v380 = vpack.c.b16 %v364, %v364
      %v381 = vpack.c.b16 %v365, %v365
      %398 = vst [vmem:[%s145] sm:$0xf] %v366
      %399 = vst [vmem:[%s145 + $0x4] sm:$0xf] %v367
      %400 = vst [vmem:[%s145 + $0x8] sm:$0xf] %v368
      %401 = vst [vmem:[%s145 + $0xc] sm:$0xf] %v369
      %402 = vst [vmem:[%s145 + $0x10] sm:$0xf] %v370
      %403 = vst [vmem:[%s145 + $0x14] sm:$0xf] %v371
      %404 = vst [vmem:[%s145 + $0x18] sm:$0xf] %v372
      %405 = vst [vmem:[%s145 + $0x1c] sm:$0xf] %v373
      %406 = vst [vmem:[%s145 + $0x20] sm:$0xf] %v374
      %407 = vst [vmem:[%s145 + $0x24] sm:$0xf] %v375
      %408 = vst [vmem:[%s145 + $0x28] sm:$0xf] %v376
      %409 = vst [vmem:[%s145 + $0x2c] sm:$0xf] %v377
      %410 = vst [vmem:[%s145 + $0x30] sm:$0xf] %v378
      %411 = vst [vmem:[%s145 + $0x34] sm:$0xf] %v379
      %412 = vst [vmem:[%s145 + $0x38] sm:$0xf] %v380
      %413 = vst [vmem:[%s145 + $0x3c] sm:$0xf] %v381
      %s414 = smul.u32 16, %s13
      %p415 = scmp.lt.s32.totalorder %s414, 31
      %s416 = scalar_select %p415, %s414, 31
      %s417 = smul.addr %s416, 4
      %s418 = scalar_lea.vmem %s2, %s417
      // Predicated region
      $region29: #{gcn_forward.4} parent=27 // pred_check
        %p419 = pneg %p78
      $region30: #{gcn_forward.4} parent=27 // pred_check_branch
        %421 = sbr.rel (%p419) target = $region32
      $region31: #{gcn_forward.4} parent=27 // pred_region
        %s422 = smul.u32 16, %s13
      $region32: #{gcn_forward.4} parent=27 // pred_fallthru
        _
    $region28: #{gcn_forward.4} parent=5 // pred_fallthru
      _
    %p423 = scmp.le.s32.totalorder 2, %s8
    // Predicated region
    $region33: #{gcn_forward.4} parent=5 // pred_check
      %p424 = pneg %p423
    $region34: #{gcn_forward.4} parent=5 // pred_check_branch
      %426 = sbr.rel (%p424) target = $region36
    $region35: #{gcn_forward.4} parent=5 // pred_region
      %s427 = ssub.s32 %s8, 2
      // Predicated region
      $region37: #{gcn_forward.4} parent=35 // pred_check
        %p428 = pneg %p84
      $region38: #{gcn_forward.4} parent=35 // pred_check_branch
        %430 = sbr.rel (%p428) target = $region40
      $region39: #{gcn_forward.4} parent=35 // pred_region
        %s431 = smul.u32 16, %s14
        %p432 = scmp.lt.s32.totalorder %s431, 31
        %s433 = scalar_select %p432, %s431, 31
        %s434 = smul.addr %s433, 4
        %s435 = scalar_lea.vmem %s2, %s434
      $region40: #{gcn_forward.4} parent=35 // pred_fallthru
        _
    $region36: #{gcn_forward.4} parent=5 // pred_fallthru
      _
  $region6: #{gcn_forward.4} parent=0 // loop_footer
    %s12 = sadd.s32 1, %s8
  $region7: #{gcn_forward.4} parent=0 // loop_footer_branch
    %7 = sbr.rel target = $region3
  $region8: #{gcn_forward.4} parent=0 // loop_exit
    _

// kernel: gcn_forward.5
$region0: #{gcn_forward.5}
  #allocation0 [shape = 'u32[]', space=smem, size = 0x4, offset = 0x4, fixed_abs, tag = 'smem constant byte address 0x4 - core index']
  #allocation1 [shape = 'u32[144,128]{1,0:T(1,128)}', space=vmem, size = 0x12000, scoped, tag = 'internal scratch']
  #allocation2 [shape = 'f32[128,128]{1,0:T(8,128)}', space=vmem, size = 0x10000, scoped, tag = 'scratch operand']
  %s0 = inlined_call_operand.vmem [shape: bf16[256,256], index: 0, kind: input, shape index: {}]
  %s1 = inlined_call_operand.vmem [shape: bf16[256,128], index: 1, kind: input, shape index: {}]
  %s2 = inlined_call_operand.vmem [shape: f32[1,128], index: 2, kind: input, shape index: {}]
  %s3 = inlined_call_operand.vmem [shape: bf16[256,128], index: 3, kind: output, shape index: {}]
  %s4 = sld [smem:[#allocation0]]
  $region94: #{gcn_forward.5} parent=0
    _
  %s6 = ssub.s32 1, %s4
  %s7 = scalar_select 0, %s6, %s4
  $region1: #{gcn_forward.5} parent=0
    #allocation3 [shape = 'u8[65536]{0}', space=vmem, size = 0x10000, scoped, tag = 'input window, operand 0']
    loop: start=0, step=1, limit=6
    $region2: #{gcn_forward.5} parent=1 // loop_pre_header
      _
    $region3: #{gcn_forward.5} parent=1 // loop_header
      %s9 = sphi 0, %s13
      %p10 = scmp.ge.s32.totalorder %s9, 6
      %s16 = sphi 0, %s28
      %s17 = sphi 0, %s24
      %s18 = sphi 0, %s16
      %s19 = sphi 0, %s17
      %s20 = sphi 0, %s18
      %s21 = sphi 0, %s19
      %s33 = sphi 0, %s35
      %s36 = sphi 0, %s33
      %s37 = sphi 0, %s36
      %s53 = sphi 0, %s37
      %s59 = sphi 0, %s61
      %s62 = sphi 0, %s59
      %s63 = sphi 0, %s62
      %s79 = sphi 0, %s63
      %s83 = sphi 0, %s83
      %s85 = sphi 0, %s83
      %s86 = sphi 0, %s85
      %s100 = sphi 0, %s86
      %s106 = sphi 0, %s108
      %s109 = sphi 0, %s106
      %s110 = sphi 0, %s109
      %s126 = sphi 0, %s110
    $region4: #{gcn_forward.5} parent=1 // loop_header_branch
      %12 = sbr.rel (%p10) target = $region8
    $region5: #{gcn_forward.5} parent=1 // loop_body
      %s14 = ssub.s32 %s9, 1
      %s15 = ssub.s32 %s9, 2
      %s22 = sadd.s32 1, %s17
      %p23 = scmp.ge.s32.totalorder %s22, 2
      %s24 = scalar_select %p23, 0, %s22
      %s25 = sadd.s32 1, %s16
      %s26 = scalar_select %p23, %s25, %s16
      %p27 = scmp.ge.s32.totalorder %s26, 2
      %s28 = scalar_select %p27, 0, %s26
      %s29 = ssub.s32 %s16, %s28
      %s30 = ssub.s32 %s17, %s24
      %s31 = sor.u32 %s29, %s30
      %p32 = scmp.eq.s32.totalorder %s31, 0
      %s34 = sadd.s32 %s33, 1
      %s35 = scalar_select %p32, %s33, %s34
      %p38 = pneg %p32
      %p39 = scmp.eq.s32.totalorder %s9, 3
      %p40 = por %p38, %p39
      %p41 = scmp.ne.s32.totalorder %s33, %s36
      %p42 = scmp.eq.s32.totalorder %s9, 0
      %p43 = por %p41, %p42
      %p44 = scmp.ne.s32.totalorder %s33, %s36
      %p45 = scmp.eq.s32.totalorder %s14, 3
      %p46 = por %p44, %p45
      %p47 = scmp.ne.s32.totalorder %s36, %s37
      %p48 = scmp.eq.s32.totalorder %s14, 0
      %p49 = por %p47, %p48
      %p50 = scmp.ne.s32.totalorder %s36, %s37
      %p51 = scmp.eq.s32.totalorder %s15, 3
      %p52 = por %p50, %p51
      %p54 = scmp.ne.s32.totalorder %s37, %s53
      %p55 = scmp.eq.s32.totalorder %s15, 0
      %p56 = por %p54, %p55
      %s57 = ssub.s32 %s17, %s24
      %p58 = scmp.eq.s32.totalorder %s57, 0
      %s60 = sadd.s32 %s59, 1
      %s61 = scalar_select %p58, %s59, %s60
      %p64 = pneg %p58
      %p65 = scmp.eq.s32.totalorder %s9, 3
      %p66 = por %p64, %p65
      %p67 = scmp.ne.s32.totalorder %s59, %s62
      %p68 = scmp.eq.s32.totalorder %s9, 0
      %p69 = por %p67, %p68
      %p70 = scmp.ne.s32.totalorder %s59, %s62
      %p71 = scmp.eq.s32.totalorder %s14, 3
      %p72 = por %p70, %p71
      %p73 = scmp.ne.s32.totalorder %s62, %s63
      %p74 = scmp.eq.s32.totalorder %s14, 0
      %p75 = por %p73, %p74
      %p76 = scmp.ne.s32.totalorder %s62, %s63
      %p77 = scmp.eq.s32.totalorder %s15, 3
      %p78 = por %p76, %p77
      %p80 = scmp.ne.s32.totalorder %s63, %s79
      %p81 = scmp.eq.s32.totalorder %s15, 0
      %p82 = por %p80, %p81
      %s84 = sadd.s32 %s83, 1
      %p87 = scmp.eq.s32.totalorder %s9, 3
      %p88 = scmp.ne.s32.totalorder %s83, %s85
      %p89 = scmp.eq.s32.totalorder %s9, 0
      %p90 = por %p88, %p89
      %p91 = scmp.ne.s32.totalorder %s83, %s85
      %p92 = scmp.eq.s32.totalorder %s14, 3
      %p93 = por %p91, %p92
      %p94 = scmp.ne.s32.totalorder %s85, %s86
      %p95 = scmp.eq.s32.totalorder %s14, 0
      %p96 = por %p94, %p95
      %p97 = scmp.ne.s32.totalorder %s85, %s86
      %p98 = scmp.eq.s32.totalorder %s15, 3
      %p99 = por %p97, %p98
      %p101 = scmp.ne.s32.totalorder %s86, %s100
      %p102 = scmp.eq.s32.totalorder %s15, 0
      %p103 = por %p101, %p102
      %s104 = ssub.s32 %s16, %s28
      %p105 = scmp.eq.s32.totalorder %s104, 0
      %s107 = sadd.s32 %s106, 1
      %s108 = scalar_select %p105, %s106, %s107
      %p111 = pneg %p105
      %p112 = scmp.eq.s32.totalorder %s9, 3
      %p113 = por %p111, %p112
      %p114 = scmp.ne.s32.totalorder %s106, %s109
      %p115 = scmp.eq.s32.totalorder %s9, 0
      %p116 = por %p114, %p115
      %p117 = scmp.ne.s32.totalorder %s106, %s109
      %p118 = scmp.eq.s32.totalorder %s14, 3
      %p119 = por %p117, %p118
      %p120 = scmp.ne.s32.totalorder %s109, %s110
      %p121 = scmp.eq.s32.totalorder %s14, 0
      %p122 = por %p120, %p121
      %p123 = scmp.ne.s32.totalorder %s109, %s110
      %p124 = scmp.eq.s32.totalorder %s15, 3
      %p125 = por %p123, %p124
      %p127 = scmp.ne.s32.totalorder %s110, %s126
      %p128 = scmp.eq.s32.totalorder %s15, 0
      %p129 = por %p127, %p128
      %p130 = scmp.le.s32.totalorder 1, %s9
      %p131 = scmp.lt.s32.totalorder %s9, 5
      %p132 = pnand %p130, %p131
      %p133 = pneg %p132
      // Predicated region
      $region9: #{gcn_forward.5} parent=5 // pred_check
        _
      $region10: #{gcn_forward.5} parent=5 // pred_check_branch
        %135 = sbr.rel (%p132) target = $region12
      $region11: #{gcn_forward.5} parent=5 // pred_region
        %s136 = ssub.s32 %s9, 1
        // Predicated region
        $region13: #{gcn_forward.5} parent=11 // pred_check
          %p137 = pneg %p96
        $region14: #{gcn_forward.5} parent=11 // pred_check_branch
          %139 = sbr.rel (%p137) target = $region16
        $region15: #{gcn_forward.5} parent=11 // pred_region
          _
        $region16: #{gcn_forward.5} parent=11 // pred_fallthru
          _
      $region12: #{gcn_forward.5} parent=5 // pred_fallthru
        _
      %p140 = scmp.lt.s32.totalorder %s9, 4
      // Predicated region
      $region17: #{gcn_forward.5} parent=5 // pred_check
        %p141 = pneg %p140
      $region18: #{gcn_forward.5} parent=5 // pred_check_branch
        %143 = sbr.rel (%p141) target = $region20
      $region19: #{gcn_forward.5} parent=5 // pred_region
        // Predicated region
        $region21: #{gcn_forward.5} parent=19 // pred_check
          %p144 = pneg %p43
        $region22: #{gcn_forward.5} parent=19 // pred_check_branch
          %146 = sbr.rel (%p144) target = $region24
        $region23: #{gcn_forward.5} parent=19 // pred_region
          %s147 = sand.u32 %s33, 1
          %s148 = sand.u32 %s33, 1
          %s149 = smul.addr %s148, 64
          %s150 = scalar_lea.vmem [#allocation3], %s149
          %s151 = smul.u32 16, %s16
          %s152 = smul.addr %s151, 2
          %s153 = sadd.s32 %s17, %s152
          %s154 = smul.addr %s153, 4
          %s155 = scalar_lea.vmem %s0, %s154
          // Predicated region
          $region25: #{gcn_forward.5} parent=23 // pred_check
            _
          $region26: #{gcn_forward.5} parent=23 // pred_check_branch
            %157 = sbr.rel (0) target = $region28
          $region27: #{gcn_forward.5} parent=23 // pred_region
            // Predicated region
            $region29: #{gcn_forward.5} parent=27 // pred_check
              _
            $region30: #{gcn_forward.5} parent=27 // pred_check_branch
              %159 = sbr.rel target = $region32
            $region31: #{gcn_forward.5} parent=27 // pred_region
              // Predicated region
              $region44: #{gcn_forward.5} parent=31 // pred_check
                _
              $region45: #{gcn_forward.5} parent=31 // pred_check_branch
                %204 = sbr.rel (0) target = $region47
              $region46: #{gcn_forward.5} parent=31 // pred_region
                loop: start=0, step=1, limit=1
                $region48: #{gcn_forward.5} parent=46 // loop_pre_header
                  _
                $region49: #{gcn_forward.5} parent=46 // loop_header
                  %s206 = sphi 0, %s210
                  %p207 = scmp.ge.s32.totalorder %s206, 1
                  %s211 = sphi %s155, %s155
                  %s212 = sphi %s150, %s150
                $region50: #{gcn_forward.5} parent=46 // loop_header_branch
                  %209 = sbr.rel (%p207) target = $region54
                $region51: #{gcn_forward.5} parent=46 // loop_body
                  _
                $region52: #{gcn_forward.5} parent=46 // loop_footer
                  %s210 = sadd.s32 1, %s206
                $region53: #{gcn_forward.5} parent=46 // loop_footer_branch
                  %205 = sbr.rel target = $region49
                $region54: #{gcn_forward.5} parent=46 // loop_exit
                  _
                loop: start=0, step=1, limit=1
                $region55: #{gcn_forward.5} parent=46 // loop_pre_header
                  _
                $region56: #{gcn_forward.5} parent=46 // loop_header
                  %s215 = sphi 0, %s219
                  %p216 = scmp.ge.s32.totalorder %s215, 1
                  %s220 = sphi %s155, %s155
                  %s221 = sphi %s150, %s150
                $region57: #{gcn_forward.5} parent=46 // loop_header_branch
                  %218 = sbr.rel (%p216) target = $region61
                $region58: #{gcn_forward.5} parent=46 // loop_body
                  %v222 = vld [vmem:[%s220] sm:$0xf]
                  %223 = vst [vmem:[%s221] sm:$0xf] %v222
                  %v224 = vld [vmem:[%s220 + $0x8] sm:$0xf]
                  %225 = vst [vmem:[%s221 + $0x4] sm:$0xf] %v224
                  %v226 = vld [vmem:[%s220 + $0x10] sm:$0xf]
                  %227 = vst [vmem:[%s221 + $0x8] sm:$0xf] %v226
                  %v228 = vld [vmem:[%s220 + $0x18] sm:$0xf]
                  %229 = vst [vmem:[%s221 + $0xc] sm:$0xf] %v228
                  %v230 = vld [vmem:[%s220 + $0x20] sm:$0xf]
                  %231 = vst [vmem:[%s221 + $0x10] sm:$0xf] %v230
                  %v232 = vld [vmem:[%s220 + $0x28] sm:$0xf]
                  %233 = vst [vmem:[%s221 + $0x14] sm:$0xf] %v232
                  %v234 = vld [vmem:[%s220 + $0x30] sm:$0xf]
                  %235 = vst [vmem:[%s221 + $0x18] sm:$0xf] %v234
                  %v236 = vld [vmem:[%s220 + $0x38] sm:$0xf]
                  %237 = vst [vmem:[%s221 + $0x1c] sm:$0xf] %v236
                  %v238 = vld [vmem:[%s220 + $0x40] sm:$0xf]
                  %239 = vst [vmem:[%s221 + $0x20] sm:$0xf] %v238
                  %v240 = vld [vmem:[%s220 + $0x48] sm:$0xf]
                  %241 = vst [vmem:[%s221 + $0x24] sm:$0xf] %v240
                  %v242 = vld [vmem:[%s220 + $0x50] sm:$0xf]
                  %243 = vst [vmem:[%s221 + $0x28] sm:$0xf] %v242
                  %v244 = vld [vmem:[%s220 + $0x58] sm:$0xf]
                  %245 = vst [vmem:[%s221 + $0x2c] sm:$0xf] %v244
                  %v246 = vld [vmem:[%s220 + $0x60] sm:$0xf]
                  %247 = vst [vmem:[%s221 + $0x30] sm:$0xf] %v246
                  %v248 = vld [vmem:[%s220 + $0x68] sm:$0xf]
                  %249 = vst [vmem:[%s221 + $0x34] sm:$0xf] %v248
                  %v250 = vld [vmem:[%s220 + $0x70] sm:$0xf]
                  %251 = vst [vmem:[%s221 + $0x38] sm:$0xf] %v250
                  %v252 = vld [vmem:[%s220 + $0x78] sm:$0xf]
                  %253 = vst [vmem:[%s221 + $0x3c] sm:$0xf] %v252
                $region59: #{gcn_forward.5} parent=46 // loop_footer
                  %s219 = sadd.s32 1, %s215
                $region60: #{gcn_forward.5} parent=46 // loop_footer_branch
                  %214 = sbr.rel target = $region56
                $region61: #{gcn_forward.5} parent=46 // loop_exit
                  _
              $region47: #{gcn_forward.5} parent=31 // pred_fallthru
                _
            $region32: #{gcn_forward.5} parent=27 // pred_fallthru
              _
            // Predicated region
            $region33: #{gcn_forward.5} parent=27 // pred_check
              _
            $region34: #{gcn_forward.5} parent=27 // pred_check_branch
              %161 = sbr.rel (0) target = $region36
            $region35: #{gcn_forward.5} parent=27 // pred_region
              loop: start=0, step=1, limit=1
              $region37: #{gcn_forward.5} parent=35 // loop_pre_header
                _
              $region38: #{gcn_forward.5} parent=35 // loop_header
                %s164 = sphi 0, %s168
                %p165 = scmp.ge.s32.totalorder %s164, 1
                %s169 = sphi %s155, %s155
                %s170 = sphi %s150, %s150
              $region39: #{gcn_forward.5} parent=35 // loop_header_branch
                %167 = sbr.rel (%p165) target = $region43
              $region40: #{gcn_forward.5} parent=35 // loop_body
                %v171 = vld [vmem:[%s169] sm:$0xf]
                %172 = vst [vmem:[%s170] sm:$0xf] %v171
                %v173 = vld [vmem:[%s169 + $0x8] sm:$0xf]
                %174 = vst [vmem:[%s170 + $0x4] sm:$0xf] %v173
                %v175 = vld [vmem:[%s169 + $0x10] sm:$0xf]
                %176 = vst [vmem:[%s170 + $0x8] sm:$0xf] %v175
                %v177 = vld [vmem:[%s169 + $0x18] sm:$0xf]
                %178 = vst [vmem:[%s170 + $0xc] sm:$0xf] %v177
                %v179 = vld [vmem:[%s169 + $0x20] sm:$0xf]
                %180 = vst [vmem:[%s170 + $0x10] sm:$0xf] %v179
                %v181 = vld [vmem:[%s169 + $0x28] sm:$0xf]
                %182 = vst [vmem:[%s170 + $0x14] sm:$0xf] %v181
                %v183 = vld [vmem:[%s169 + $0x30] sm:$0xf]
                %184 = vst [vmem:[%s170 + $0x18] sm:$0xf] %v183
                %v185 = vld [vmem:[%s169 + $0x38] sm:$0xf]
                %186 = vst [vmem:[%s170 + $0x1c] sm:$0xf] %v185
                %v187 = vld [vmem:[%s169 + $0x40] sm:$0xf]
                %188 = vst [vmem:[%s170 + $0x20] sm:$0xf] %v187
                %v189 = vld [vmem:[%s169 + $0x48] sm:$0xf]
                %190 = vst [vmem:[%s170 + $0x24] sm:$0xf] %v189
                %v191 = vld [vmem:[%s169 + $0x50] sm:$0xf]
                %192 = vst [vmem:[%s170 + $0x28] sm:$0xf] %v191
                %v193 = vld [vmem:[%s169 + $0x58] sm:$0xf]
                %194 = vst [vmem:[%s170 + $0x2c] sm:$0xf] %v193
                %v195 = vld [vmem:[%s169 + $0x60] sm:$0xf]
                %196 = vst [vmem:[%s170 + $0x30] sm:$0xf] %v195
                %v197 = vld [vmem:[%s169 + $0x68] sm:$0xf]
                %198 = vst [vmem:[%s170 + $0x34] sm:$0xf] %v197
                %v199 = vld [vmem:[%s169 + $0x70] sm:$0xf]
                %200 = vst [vmem:[%s170 + $0x38] sm:$0xf] %v199
                %v201 = vld [vmem:[%s169 + $0x78] sm:$0xf]
                %202 = vst [vmem:[%s170 + $0x3c] sm:$0xf] %v201
              $region41: #{gcn_forward.5} parent=35 // loop_footer
                %s168 = sadd.s32 1, %s164
              $region42: #{gcn_forward.5} parent=35 // loop_footer_branch
                %163 = sbr.rel target = $region38
              $region43: #{gcn_forward.5} parent=35 // loop_exit
                _
            $region36: #{gcn_forward.5} parent=27 // pred_fallthru
              _
          $region28: #{gcn_forward.5} parent=23 // pred_fallthru
            _
          %254 = vnop
        $region24: #{gcn_forward.5} parent=19 // pred_fallthru
          _
        // Predicated region
        $region62: #{gcn_forward.5} parent=19 // pred_check
          %p255 = pneg %p69
        $region63: #{gcn_forward.5} parent=19 // pred_check_branch
          %257 = sbr.rel (%p255) target = $region65
        $region64: #{gcn_forward.5} parent=19 // pred_region
          %s258 = smul.u32 16, %s17
          %p259 = scmp.lt.s32.totalorder %s258, 31
          %s260 = scalar_select %p259, %s258, 31
          %s261 = smul.addr %s260, 4
          %s262 = scalar_lea.vmem %s1, %s261
          %s263 = smul.u32 16, %s17
        $region65: #{gcn_forward.5} parent=19 // pred_fallthru
          _
      $region20: #{gcn_forward.5} parent=5 // pred_fallthru
        _
      %p264 = scmp.le.s32.totalorder 1, %s9
      %p265 = scmp.lt.s32.totalorder %s9, 5
      %p266 = pnand %p264, %p265
      %p267 = pneg %p266
      // Predicated region
      $region66: #{gcn_forward.5} parent=5 // pred_check
        _
      $region67: #{gcn_forward.5} parent=5 // pred_check_branch
        %269 = sbr.rel (%p266) target = $region69
      $region68: #{gcn_forward.5} parent=5 // pred_region
        %s270 = ssub.s32 %s9, 1
        %s271 = sand.u32 %s36, 1
        %s272 = sand.u32 %s36, 1
        %s273 = smul.addr %s272, 64
        %s274 = scalar_lea.vmem [#allocation3], %s273
        // Predicated region
        $region70: #{gcn_forward.5} parent=68 // pred_check
          %p275 = pneg %p49
        $region71: #{gcn_forward.5} parent=68 // pred_check_branch
          %277 = sbr.rel (%p275) target = $region73
        $region72: #{gcn_forward.5} parent=68 // pred_region
          _
        $region73: #{gcn_forward.5} parent=68 // pred_fallthru
          _
        %s278 = sand.u32 %s36, 1
        %s279 = sand.u32 %s36, 1
        %s280 = smul.addr %s279, 64
        %s281 = scalar_lea.vmem [#allocation3], %s280
        %p282 = pneg %p49
        %p283 = pneg %p46
        %s284 = smul.u32 16, %s19
        %p285 = scmp.lt.s32.totalorder %s284, 31
        %s286 = scalar_select %p285, %s284, 31
        %s287 = smul.addr %s286, 4
        %s288 = scalar_lea.vmem %s1, %s287
        %p289 = pneg %p75
        %p290 = pneg %p72
        %p291 = pneg %p96
        %p292 = pneg %p93
        %p293 = pneg %p122
        %p294 = pneg %p119
        %s295 = smul.u32 16, %s18
        %p296 = scmp.lt.s32.totalorder %s295, 31
        %s297 = scalar_select %p296, %s295, 31
        %s298 = smul.addr %s297, 4
        %s299 = scalar_lea.vmem %s3, %s298
        %s300 = smul.u32 16, %s18
        %s301 = smul.u32 16, %s19
        %p302 = scmp.lt.s32.totalorder %s301, 31
        %s303 = scalar_select %p302, %s301, 31
        %s304 = smul.addr %s303, 4
        %s305 = scalar_lea.vmem %s1, %s304
        %s306 = smul.u32 16, %s19
        %s307 = smul.u32 16, %s18
        %p308 = scmp.lt.s32.totalorder %s307, 31
        %s309 = scalar_select %p308, %s307, 31
        %s310 = smul.addr %s309, 4
        %s311 = scalar_lea.vmem %s3, %s310
        %s312 = smul.u32 16, %s18
        %p314 = scmp.eq.s32.totalorder %s19, 0
        // Predicated region
        $region74: #{gcn_forward.5} parent=68 // pred_check
          %p315 = pneg %p314
        $region75: #{gcn_forward.5} parent=68 // pred_check_branch
          %317 = sbr.rel (%p315) target = $region77
        $region76: #{gcn_forward.5} parent=68 // pred_region
          %318 = vst [vmem:[#allocation2] sm:$0xff] 0.0
          %319 = vst [vmem:[#allocation2 + $0x8] sm:$0xff] 0.0
          %320 = vst [vmem:[#allocation2 + $0x10] sm:$0xff] 0.0
          %321 = vst [vmem:[#allocation2 + $0x18] sm:$0xff] 0.0
          %322 = vst [vmem:[#allocation2 + $0x20] sm:$0xff] 0.0
          %323 = vst [vmem:[#allocation2 + $0x28] sm:$0xff] 0.0
          %324 = vst [vmem:[#allocation2 + $0x30] sm:$0xff] 0.0
          %325 = vst [vmem:[#allocation2 + $0x38] sm:$0xff] 0.0
          %326 = vst [vmem:[#allocation2 + $0x40] sm:$0xff] 0.0
          %327 = vst [vmem:[#allocation2 + $0x48] sm:$0xff] 0.0
          %328 = vst [vmem:[#allocation2 + $0x50] sm:$0xff] 0.0
          %329 = vst [vmem:[#allocation2 + $0x58] sm:$0xff] 0.0
          %330 = vst [vmem:[#allocation2 + $0x60] sm:$0xff] 0.0
          %331 = vst [vmem:[#allocation2 + $0x68] sm:$0xff] 0.0
          %332 = vst [vmem:[#allocation2 + $0x70] sm:$0xff] 0.0
          %333 = vst [vmem:[#allocation2 + $0x78] sm:$0xff] 0.0
        $region77: #{gcn_forward.5} parent=68 // pred_fallthru
          _
        %v334 = vld [vmem:[#allocation2] sm:$0xff]
        %v335 = vld [vmem:[#allocation2 + $0x8] sm:$0xff]
        %v336 = vld [vmem:[#allocation2 + $0x10] sm:$0xff]
        %v337 = vld [vmem:[#allocation2 + $0x18] sm:$0xff]
        %v338 = vld [vmem:[#allocation2 + $0x20] sm:$0xff]
        %v339 = vld [vmem:[#allocation2 + $0x28] sm:$0xff]
        %v340 = vld [vmem:[#allocation2 + $0x30] sm:$0xff]
        %v341 = vld [vmem:[#allocation2 + $0x38] sm:$0xff]
        %v342 = vld [vmem:[#allocation2 + $0x40] sm:$0xff]
        %v343 = vld [vmem:[#allocation2 + $0x48] sm:$0xff]
        %v344 = vld [vmem:[#allocation2 + $0x50] sm:$0xff]
        %v345 = vld [vmem:[#allocation2 + $0x58] sm:$0xff]
        %v346 = vld [vmem:[#allocation2 + $0x60] sm:$0xff]
        %v347 = vld [vmem:[#allocation2 + $0x68] sm:$0xff]
        %v348 = vld [vmem:[#allocation2 + $0x70] sm:$0xff]
        %v349 = vld [vmem:[#allocation2 + $0x78] sm:$0xff]
        %v350 = vld [vmem:[%s274] sm:$0xf]
        %v351 = vld [vmem:[%s274 + $0x4] sm:$0xf]
        %v352 = vld [vmem:[%s274 + $0x8] sm:$0xf]
        %v353 = vld [vmem:[%s274 + $0xc] sm:$0xf]
        %v354 = vld [vmem:[%s274 + $0x10] sm:$0xf]
        %v355 = vld [vmem:[%s274 + $0x14] sm:$0xf]
        %v356 = vld [vmem:[%s274 + $0x18] sm:$0xf]
        %v357 = vld [vmem:[%s274 + $0x1c] sm:$0xf]
        %v358 = vld [vmem:[%s274 + $0x20] sm:$0xf]
        %v359 = vld [vmem:[%s274 + $0x24] sm:$0xf]
        %v360 = vld [vmem:[%s274 + $0x28] sm:$0xf]
        %v361 = vld [vmem:[%s274 + $0x2c] sm:$0xf]
        %v362 = vld [vmem:[%s274 + $0x30] sm:$0xf]
        %v363 = vld [vmem:[%s274 + $0x34] sm:$0xf]
        %v364 = vld [vmem:[%s274 + $0x38] sm:$0xf]
        %v365 = vld [vmem:[%s274 + $0x3c] sm:$0xf]
        %v366 = vld [vmem:[%s305] sm:$0xf]
        %v367 = vld [vmem:[%s305 + $0x4] sm:$0xf]
        %v368 = vld [vmem:[%s305 + $0x8] sm:$0xf]
        %v369 = vld [vmem:[%s305 + $0xc] sm:$0xf]
        %v370 = vld [vmem:[%s305 + $0x10] sm:$0xf]
        %v371 = vld [vmem:[%s305 + $0x14] sm:$0xf]
        %v372 = vld [vmem:[%s305 + $0x18] sm:$0xf]
        %v373 = vld [vmem:[%s305 + $0x1c] sm:$0xf]
        %v374 = vld [vmem:[%s305 + $0x20] sm:$0xf]
        %v375 = vld [vmem:[%s305 + $0x24] sm:$0xf]
        %v376 = vld [vmem:[%s305 + $0x28] sm:$0xf]
        %v377 = vld [vmem:[%s305 + $0x2c] sm:$0xf]
        %v378 = vld [vmem:[%s305 + $0x30] sm:$0xf]
        %v379 = vld [vmem:[%s305 + $0x34] sm:$0xf]
        %v380 = vld [vmem:[%s305 + $0x38] sm:$0xf]
        %v381 = vld [vmem:[%s305 + $0x3c] sm:$0xf]
        %v398 = vunpack.c.l.b16 %v350
        %v399 = vunpack.c.l.b16 %v351
        %v400 = vunpack.c.l.b16 %v352
        %v401 = vunpack.c.l.b16 %v353
        %v402 = vunpack.c.l.b16 %v354
        %v403 = vunpack.c.l.b16 %v355
        %v404 = vunpack.c.l.b16 %v356
        %v405 = vunpack.c.l.b16 %v357
        %v406 = vunpack.c.l.b16 %v358
        %v407 = vunpack.c.l.b16 %v359
        %v408 = vunpack.c.l.b16 %v360
        %v409 = vunpack.c.l.b16 %v361
        %v410 = vunpack.c.l.b16 %v362
        %v411 = vunpack.c.l.b16 %v363
        %v412 = vunpack.c.l.b16 %v364
        %v413 = vunpack.c.l.b16 %v365
        %v414 = vpack.c.b16 %v399, %v398
        %v415 = vpack.c.b16 %v401, %v400
        %v416 = vpack.c.b16 %v403, %v402
        %v417 = vpack.c.b16 %v405, %v404
        %v418 = vpack.c.b16 %v407, %v406
        %v419 = vpack.c.b16 %v409, %v408
        %v420 = vpack.c.b16 %v411, %v410
        %v421 = vpack.c.b16 %v413, %v412
        %v446 = vunpack.c.l.b16 %v366
        %v447 = vunpack.c.l.b16 %v367
        %v448 = vunpack.c.l.b16 %v368
        %v449 = vunpack.c.l.b16 %v369
        %v450 = vunpack.c.l.b16 %v370
        %v451 = vunpack.c.l.b16 %v371
        %v452 = vunpack.c.l.b16 %v372
        %v453 = vunpack.c.l.b16 %v373
        %v454 = vunpack.c.l.b16 %v374
        %v455 = vunpack.c.l.b16 %v375
        %v456 = vunpack.c.l.b16 %v376
        %v457 = vunpack.c.l.b16 %v377
        %v458 = vunpack.c.l.b16 %v378
        %v459 = vunpack.c.l.b16 %v379
        %v460 = vunpack.c.l.b16 %v380
        %v461 = vunpack.c.l.b16 %v381
        %v462 = vpack.c.b16 %v447, %v446
        %v463 = vpack.c.b16 %v449, %v448
        %v464 = vpack.c.b16 %v451, %v450
        %v465 = vpack.c.b16 %v453, %v452
        %v466 = vpack.c.b16 %v455, %v454
        %v467 = vpack.c.b16 %v457, %v456
        %v468 = vpack.c.b16 %v459, %v458
        %v469 = vpack.c.b16 %v461, %v460
        %478 = vmatprep.subr.bf16.mxu0 0
        %479 = vmatpush1.bf16.msra.mxu0 %v462
        %480 = vmatprep.subr.bf16.mxu0 0
        %481 = vmatpush1.bf16.msra.mxu0 %v463
        %482 = vmatprep.subr.bf16.mxu0 0
        %483 = vmatpush1.bf16.msra.mxu0 %v464
        %484 = vmatprep.subr.bf16.mxu0 0
        %485 = vmatpush1.bf16.msra.mxu0 %v465
        %486 = vmatprep.subr.bf16.mxu0 0
        %487 = vmatpush1.bf16.msra.mxu0 %v466
        %488 = vmatprep.subr.bf16.mxu0 0
        %489 = vmatpush1.bf16.msra.mxu0 %v467
        %490 = vmatprep.subr.bf16.mxu0 0
        %491 = vmatpush1.bf16.msra.mxu0 %v468
        %492 = vmatprep.subr.bf16.mxu0 0
        %493 = vmatpush1.bf16.msra.mxu0 %v469
        %494 = vmatprep.subr.bf16.mxu0 0
        %495 = vmatpush1.bf16.msra.mxu0 0
        %496 = vmatprep.subr.bf16.mxu0 0
        %497 = vmatpush1.bf16.msra.mxu0 0
        %498 = vmatprep.subr.bf16.mxu0 0
        %499 = vmatpush1.bf16.msra.mxu0 0
        %500 = vmatprep.subr.bf16.mxu0 0
        %501 = vmatpush1.bf16.msra.mxu0 0
        %502 = vmatprep.subr.bf16.mxu0 0
        %503 = vmatpush1.bf16.msra.mxu0 0
        %504 = vmatprep.subr.bf16.mxu0 0
        %505 = vmatpush1.bf16.msra.mxu0 0
        %506 = vmatprep.subr.bf16.mxu0 0
        %507 = vmatpush1.bf16.msra.mxu0 0
        %508 = vmatprep.subr.bf16.mxu0 0
        %509 = vmatpush1.bf16.msra.mxu0 0
        %510 = vmatprep.mubr.bf16.mxu0 0
        %511 = vmatmul.mubr.bf16.gmra.mrb[0].mxu0 %v414
        %v512 = vpop.f32.mrb[0].mxu0
        %v513 = vadd.f32 0.0, %v512
        %v514 = vpop.f32.mrb[0].mxu0
        %v515 = vpop.f32.mrb[0].mxu0
        %v516 = vadd.f32 0.0, %v515
        %v517 = vpop.f32.mrb[0].mxu0
        %518 = vmatprep.mubr.bf16.mxu0 0
        %519 = vmatmul.mubr.bf16.gmra.mrb[0].mxu0 %v415
        %v520 = vpop.f32.mrb[0].mxu0
        %v521 = vadd.f32 0.0, %v520
        %v522 = vpop.f32.mrb[0].mxu0
        %v523 = vpop.f32.mrb[0].mxu0
        %v524 = vadd.f32 0.0, %v523
        %v525 = vpop.f32.mrb[0].mxu0
        %526 = vmatprep.mubr.bf16.mxu0 0
        %527 = vmatmul.mubr.bf16.gmra.mrb[0].mxu0 %v416
        %v528 = vpop.f32.mrb[0].mxu0
        %v529 = vadd.f32 0.0, %v528
        %v530 = vpop.f32.mrb[0].mxu0
        %v531 = vpop.f32.mrb[0].mxu0
        %v532 = vadd.f32 0.0, %v531
        %v533 = vpop.f32.mrb[0].mxu0
        %534 = vmatprep.mubr.bf16.mxu0 0
        %535 = vmatmul.mubr.bf16.gmra.mrb[0].mxu0 %v417
        %v536 = vpop.f32.mrb[0].mxu0
        %v537 = vadd.f32 0.0, %v536
        %v538 = vpop.f32.mrb[0].mxu0
        %v539 = vpop.f32.mrb[0].mxu0
        %v540 = vadd.f32 0.0, %v539
        %v541 = vpop.f32.mrb[0].mxu0
        %542 = vmatprep.mubr.bf16.mxu0 0
        %543 = vmatmul.mubr.bf16.gmra.mrb[0].mxu0 %v418
        %v544 = vpop.f32.mrb[0].mxu0
        %v545 = vadd.f32 0.0, %v544
        %v546 = vpop.f32.mrb[0].mxu0
        %v547 = vpop.f32.mrb[0].mxu0
        %v548 = vadd.f32 0.0, %v547
        %v549 = vpop.f32.mrb[0].mxu0
        %550 = vmatprep.mubr.bf16.mxu0 0
        %551 = vmatmul.mubr.bf16.gmra.mrb[0].mxu0 %v419
        %v552 = vpop.f32.mrb[0].mxu0
        %v553 = vadd.f32 0.0, %v552
        %v554 = vpop.f32.mrb[0].mxu0
        %v555 = vpop.f32.mrb[0].mxu0
        %v556 = vadd.f32 0.0, %v555
        %v557 = vpop.f32.mrb[0].mxu0
        %558 = vmatprep.mubr.bf16.mxu0 0
        %559 = vmatmul.mubr.bf16.gmra.mrb[0].mxu0 %v420
        %v560 = vpop.f32.mrb[0].mxu0
        %v561 = vadd.f32 0.0, %v560
        %v562 = vpop.f32.mrb[0].mxu0
        %v563 = vpop.f32.mrb[0].mxu0
        %v564 = vadd.f32 0.0, %v563
        %v565 = vpop.f32.mrb[0].mxu0
        %566 = vmatprep.mubr.bf16.mxu0 0
        %567 = vmatmul.mubr.bf16.gmra.mrb[0].mxu0 %v421
        %v568 = vpop.f32.mrb[0].mxu0
        %v569 = vadd.f32 0.0, %v568
        %v570 = vpop.f32.mrb[0].mxu0
        %v571 = vpop.f32.mrb[0].mxu0
        %v572 = vadd.f32 0.0, %v571
        %v573 = vpop.f32.mrb[0].mxu0
        %574 = vdwg.mxu0
        %v575 = vadd.f32 %v334, %v513
        %v576 = vadd.f32 %v335, %v516
        %v577 = vadd.f32 %v336, %v521
        %v578 = vadd.f32 %v337, %v524
        %v579 = vadd.f32 %v338, %v529
        %v580 = vadd.f32 %v339, %v532
        %v581 = vadd.f32 %v340, %v537
        %v582 = vadd.f32 %v341, %v540
        %v583 = vadd.f32 %v342, %v545
        %v584 = vadd.f32 %v343, %v548
        %v585 = vadd.f32 %v344, %v553
        %v586 = vadd.f32 %v345, %v556
        %v587 = vadd.f32 %v346, %v561
        %v588 = vadd.f32 %v347, %v564
        %v589 = vadd.f32 %v348, %v569
        %v590 = vadd.f32 %v349, %v572
        %591 = vst [vmem:[#allocation2] sm:$0xff] %v575
        %592 = vst [vmem:[#allocation2 + $0x8] sm:$0xff] %v576
        %593 = vst [vmem:[#allocation2 + $0x10] sm:$0xff] %v577
        %594 = vst [vmem:[#allocation2 + $0x18] sm:$0xff] %v578
        %595 = vst [vmem:[#allocation2 + $0x20] sm:$0xff] %v579
        %596 = vst [vmem:[#allocation2 + $0x28] sm:$0xff] %v580
        %597 = vst [vmem:[#allocation2 + $0x30] sm:$0xff] %v581
        %598 = vst [vmem:[#allocation2 + $0x38] sm:$0xff] %v582
        %599 = vst [vmem:[#allocation2 + $0x40] sm:$0xff] %v583
        %600 = vst [vmem:[#allocation2 + $0x48] sm:$0xff] %v584
        %601 = vst [vmem:[#allocation2 + $0x50] sm:$0xff] %v585
        %602 = vst [vmem:[#allocation2 + $0x58] sm:$0xff] %v586
        %603 = vst [vmem:[#allocation2 + $0x60] sm:$0xff] %v587
        %604 = vst [vmem:[#allocation2 + $0x68] sm:$0xff] %v588
        %605 = vst [vmem:[#allocation2 + $0x70] sm:$0xff] %v589
        %606 = vst [vmem:[#allocation2 + $0x78] sm:$0xff] %v590
        %p607 = scmp.eq.s32.totalorder %s19, 1
        // Predicated region
        $region78: #{gcn_forward.5} parent=68 // pred_check
          %p608 = pneg %p607
        $region79: #{gcn_forward.5} parent=68 // pred_check_branch
          %610 = sbr.rel (%p608) target = $region81
        $region80: #{gcn_forward.5} parent=68 // pred_region
          %v611 = vld [vmem:[#allocation2] sm:$0xff]
          %v612 = vld [vmem:[#allocation2 + $0x8] sm:$0xff]
          %v613 = vld [vmem:[#allocation2 + $0x10] sm:$0xff]
          %v614 = vld [vmem:[#allocation2 + $0x18] sm:$0xff]
          %v615 = vld [vmem:[#allocation2 + $0x20] sm:$0xff]
          %v616 = vld [vmem:[#allocation2 + $0x28] sm:$0xff]
          %v617 = vld [vmem:[#allocation2 + $0x30] sm:$0xff]
          %v618 = vld [vmem:[#allocation2 + $0x38] sm:$0xff]
          %v619 = vld [vmem:[#allocation2 + $0x40] sm:$0xff]
          %v620 = vld [vmem:[#allocation2 + $0x48] sm:$0xff]
          %v621 = vld [vmem:[#allocation2 + $0x50] sm:$0xff]
          %v622 = vld [vmem:[#allocation2 + $0x58] sm:$0xff]
          %v623 = vld [vmem:[#allocation2 + $0x60] sm:$0xff]
          %v624 = vld [vmem:[#allocation2 + $0x68] sm:$0xff]
          %v625 = vld [vmem:[#allocation2 + $0x70] sm:$0xff]
          %v626 = vld [vmem:[#allocation2 + $0x78] sm:$0xff]
          %v627 = vld [vmem:[%s2] sm:$0x1]
          %v629 = vlaneseq
          %v630 = vshrl.u32 %v629, 7
          %v631 = vsub.s32 0, %v630
          %v632 = vrot.slane %v627, %v631
          %v634 = vadd.f32 %v611, %v632
          %v635 = vadd.f32 %v612, %v632
          %v636 = vadd.f32 %v613, %v632
          %v637 = vadd.f32 %v614, %v632
          %v638 = vadd.f32 %v615, %v632
          %v639 = vadd.f32 %v616, %v632
          %v640 = vadd.f32 %v617, %v632
          %v641 = vadd.f32 %v618, %v632
          %v642 = vadd.f32 %v619, %v632
          %v643 = vadd.f32 %v620, %v632
          %v644 = vadd.f32 %v621, %v632
          %v645 = vadd.f32 %v622, %v632
          %v646 = vadd.f32 %v623, %v632
          %v647 = vadd.f32 %v624, %v632
          %v648 = vadd.f32 %v625, %v632
          %v649 = vadd.f32 %v626, %v632
          %v650 = vmax.f32 %v634, 0.0
          %v651 = vmax.f32 %v635, 0.0
          %v652 = vmax.f32 %v636, 0.0
          %v653 = vmax.f32 %v637, 0.0
          %v654 = vmax.f32 %v638, 0.0
          %v655 = vmax.f32 %v639, 0.0
          %v656 = vmax.f32 %v640, 0.0
          %v657 = vmax.f32 %v641, 0.0
          %v658 = vmax.f32 %v642, 0.0
          %v659 = vmax.f32 %v643, 0.0
          %v660 = vmax.f32 %v644, 0.0
          %v661 = vmax.f32 %v645, 0.0
          %v662 = vmax.f32 %v646, 0.0
          %v663 = vmax.f32 %v647, 0.0
          %v664 = vmax.f32 %v648, 0.0
          %v665 = vmax.f32 %v649, 0.0
          %v666 = vpack.c.bf16 %v651, %v650
          %v667 = vpack.c.bf16 %v653, %v652
          %v668 = vpack.c.bf16 %v655, %v654
          %v669 = vpack.c.bf16 %v657, %v656
          %v670 = vpack.c.bf16 %v659, %v658
          %v671 = vpack.c.bf16 %v661, %v660
          %v672 = vpack.c.bf16 %v663, %v662
          %v673 = vpack.c.bf16 %v665, %v664
          %v682 = vunpack.c.l.b16 %v666
          %v683 = vunpack.c.h.b16 %v666
          %v684 = vunpack.c.l.b16 %v667
          %v685 = vunpack.c.h.b16 %v667
          %v686 = vunpack.c.l.b16 %v668
          %v687 = vunpack.c.h.b16 %v668
          %v688 = vunpack.c.l.b16 %v669
          %v689 = vunpack.c.h.b16 %v669
          %v690 = vunpack.c.l.b16 %v670
          %v691 = vunpack.c.h.b16 %v670
          %v692 = vunpack.c.l.b16 %v671
          %v693 = vunpack.c.h.b16 %v671
          %v694 = vunpack.c.l.b16 %v672
          %v695 = vunpack.c.h.b16 %v672
          %v696 = vunpack.c.l.b16 %v673
          %v697 = vunpack.c.h.b16 %v673
          %v698 = vpack.c.b16 %v682, %v682
          %v699 = vpack.c.b16 %v683, %v683
          %v700 = vpack.c.b16 %v684, %v684
          %v701 = vpack.c.b16 %v685, %v685
          %v702 = vpack.c.b16 %v686, %v686
          %v703 = vpack.c.b16 %v687, %v687
          %v704 = vpack.c.b16 %v688, %v688
          %v705 = vpack.c.b16 %v689, %v689
          %v706 = vpack.c.b16 %v690, %v690
          %v707 = vpack.c.b16 %v691, %v691
          %v708 = vpack.c.b16 %v692, %v692
          %v709 = vpack.c.b16 %v693, %v693
          %v710 = vpack.c.b16 %v694, %v694
          %v711 = vpack.c.b16 %v695, %v695
          %v712 = vpack.c.b16 %v696, %v696
          %v713 = vpack.c.b16 %v697, %v697
          %730 = vst [vmem:[%s311] sm:$0xf] %v698
          %731 = vst [vmem:[%s311 + $0x4] sm:$0xf] %v699
          %732 = vst [vmem:[%s311 + $0x8] sm:$0xf] %v700
          %733 = vst [vmem:[%s311 + $0xc] sm:$0xf] %v701
          %734 = vst [vmem:[%s311 + $0x10] sm:$0xf] %v702
          %735 = vst [vmem:[%s311 + $0x14] sm:$0xf] %v703
          %736 = vst [vmem:[%s311 + $0x18] sm:$0xf] %v704
          %737 = vst [vmem:[%s311 + $0x1c] sm:$0xf] %v705
          %738 = vst [vmem:[%s311 + $0x20] sm:$0xf] %v706
          %739 = vst [vmem:[%s311 + $0x24] sm:$0xf] %v707
          %740 = vst [vmem:[%s311 + $0x28] sm:$0xf] %v708
          %741 = vst [vmem:[%s311 + $0x2c] sm:$0xf] %v709
          %742 = vst [vmem:[%s311 + $0x30] sm:$0xf] %v710
          %743 = vst [vmem:[%s311 + $0x34] sm:$0xf] %v711
          %744 = vst [vmem:[%s311 + $0x38] sm:$0xf] %v712
          %745 = vst [vmem:[%s311 + $0x3c] sm:$0xf] %v713
        $region81: #{gcn_forward.5} parent=68 // pred_fallthru
          _
        %s746 = smul.u32 16, %s18
        %p747 = scmp.lt.s32.totalorder %s746, 31
        %s748 = scalar_select %p747, %s746, 31
        %s749 = smul.addr %s748, 4
        %s750 = scalar_lea.vmem %s3, %s749
        // Predicated region
        $region82: #{gcn_forward.5} parent=68 // pred_check
          %p751 = pneg %p119
        $region83: #{gcn_forward.5} parent=68 // pred_check_branch
          %753 = sbr.rel (%p751) target = $region85
        $region84: #{gcn_forward.5} parent=68 // pred_region
          %s754 = smul.u32 16, %s18
        $region85: #{gcn_forward.5} parent=68 // pred_fallthru
          _
      $region69: #{gcn_forward.5} parent=5 // pred_fallthru
        _
      %p755 = scmp.le.s32.totalorder 2, %s9
      // Predicated region
      $region86: #{gcn_forward.5} parent=5 // pred_check
        %p756 = pneg %p755
      $region87: #{gcn_forward.5} parent=5 // pred_check_branch
        %758 = sbr.rel (%p756) target = $region89
      $region88: #{gcn_forward.5} parent=5 // pred_region
        %s759 = ssub.s32 %s9, 2
        // Predicated region
        $region90: #{gcn_forward.5} parent=88 // pred_check
          %p760 = pneg %p125
        $region91: #{gcn_forward.5} parent=88 // pred_check_branch
          %762 = sbr.rel (%p760) target = $region93
        $region92: #{gcn_forward.5} parent=88 // pred_region
          %s763 = smul.u32 16, %s20
          %p764 = scmp.lt.s32.totalorder %s763, 31
          %s765 = scalar_select %p764, %s763, 31
          %s766 = smul.addr %s765, 4
          %s767 = scalar_lea.vmem %s3, %s766
        $region93: #{gcn_forward.5} parent=88 // pred_fallthru
          _
      $region89: #{gcn_forward.5} parent=5 // pred_fallthru
        _
    $region6: #{gcn_forward.5} parent=1 // loop_footer
      %s13 = sadd.s32 1, %s9
    $region7: #{gcn_forward.5} parent=1 // loop_footer_branch
      %8 = sbr.rel target = $region3
    $region8: #{gcn_forward.5} parent=1 // loop_exit
      _

// kernel: gcn_forward.7
$region0: #{gcn_forward.7}
  #allocation0 [shape = 'u32[]', space=smem, size = 0x4, offset = 0x4, fixed_abs, tag = 'smem constant byte address 0x4 - core index']
  #allocation1 [shape = 'u32[144,128]{1,0:T(1,128)}', space=vmem, size = 0x12000, scoped, tag = 'internal scratch']
  #allocation2 [shape = 'f32[128,128]{1,0:T(8,128)}', space=vmem, size = 0x10000, scoped, tag = 'scratch operand']
  %s0 = inlined_call_operand.vmem [shape: bf16[256,256], index: 0, kind: input, shape index: {}]
  %s1 = inlined_call_operand.vmem [shape: bf16[256,128], index: 1, kind: input, shape index: {}]
  %s2 = inlined_call_operand.vmem [shape: f32[1,128], index: 2, kind: input, shape index: {}]
  %s3 = inlined_call_operand.vmem [shape: f32[256,128], index: 3, kind: output, shape index: {}]
  %s4 = sld [smem:[#allocation0]]
  $region94: #{gcn_forward.7} parent=0
    _
  %s6 = ssub.s32 1, %s4
  %s7 = scalar_select 0, %s6, %s4
  $region1: #{gcn_forward.7} parent=0
    #allocation3 [shape = 'u8[65536]{0}', space=vmem, size = 0x10000, scoped, tag = 'input window, operand 0']
    loop: start=0, step=1, limit=6
    $region2: #{gcn_forward.7} parent=1 // loop_pre_header
      _
    $region3: #{gcn_forward.7} parent=1 // loop_header
      %s9 = sphi 0, %s13
      %p10 = scmp.ge.s32.totalorder %s9, 6
      %s16 = sphi 0, %s28
      %s17 = sphi 0, %s24
      %s18 = sphi 0, %s16
      %s19 = sphi 0, %s17
      %s20 = sphi 0, %s18
      %s21 = sphi 0, %s19
      %s33 = sphi 0, %s35
      %s36 = sphi 0, %s33
      %s37 = sphi 0, %s36
      %s53 = sphi 0, %s37
      %s59 = sphi 0, %s61
      %s62 = sphi 0, %s59
      %s63 = sphi 0, %s62
      %s79 = sphi 0, %s63
      %s83 = sphi 0, %s83
      %s85 = sphi 0, %s83
      %s86 = sphi 0, %s85
      %s100 = sphi 0, %s86
      %s106 = sphi 0, %s108
      %s109 = sphi 0, %s106
      %s110 = sphi 0, %s109
      %s126 = sphi 0, %s110
    $region4: #{gcn_forward.7} parent=1 // loop_header_branch
      %12 = sbr.rel (%p10) target = $region8
    $region5: #{gcn_forward.7} parent=1 // loop_body
      %s14 = ssub.s32 %s9, 1
      %s15 = ssub.s32 %s9, 2
      %s22 = sadd.s32 1, %s17
      %p23 = scmp.ge.s32.totalorder %s22, 2
      %s24 = scalar_select %p23, 0, %s22
      %s25 = sadd.s32 1, %s16
      %s26 = scalar_select %p23, %s25, %s16
      %p27 = scmp.ge.s32.totalorder %s26, 2
      %s28 = scalar_select %p27, 0, %s26
      %s29 = ssub.s32 %s16, %s28
      %s30 = ssub.s32 %s17, %s24
      %s31 = sor.u32 %s29, %s30
      %p32 = scmp.eq.s32.totalorder %s31, 0
      %s34 = sadd.s32 %s33, 1
      %s35 = scalar_select %p32, %s33, %s34
      %p38 = pneg %p32
      %p39 = scmp.eq.s32.totalorder %s9, 3
      %p40 = por %p38, %p39
      %p41 = scmp.ne.s32.totalorder %s33, %s36
      %p42 = scmp.eq.s32.totalorder %s9, 0
      %p43 = por %p41, %p42
      %p44 = scmp.ne.s32.totalorder %s33, %s36
      %p45 = scmp.eq.s32.totalorder %s14, 3
      %p46 = por %p44, %p45
      %p47 = scmp.ne.s32.totalorder %s36, %s37
      %p48 = scmp.eq.s32.totalorder %s14, 0
      %p49 = por %p47, %p48
      %p50 = scmp.ne.s32.totalorder %s36, %s37
      %p51 = scmp.eq.s32.totalorder %s15, 3
      %p52 = por %p50, %p51
      %p54 = scmp.ne.s32.totalorder %s37, %s53
      %p55 = scmp.eq.s32.totalorder %s15, 0
      %p56 = por %p54, %p55
      %s57 = ssub.s32 %s17, %s24
      %p58 = scmp.eq.s32.totalorder %s57, 0
      %s60 = sadd.s32 %s59, 1
      %s61 = scalar_select %p58, %s59, %s60
      %p64 = pneg %p58
      %p65 = scmp.eq.s32.totalorder %s9, 3
      %p66 = por %p64, %p65
      %p67 = scmp.ne.s32.totalorder %s59, %s62
      %p68 = scmp.eq.s32.totalorder %s9, 0
      %p69 = por %p67, %p68
      %p70 = scmp.ne.s32.totalorder %s59, %s62
      %p71 = scmp.eq.s32.totalorder %s14, 3
      %p72 = por %p70, %p71
      %p73 = scmp.ne.s32.totalorder %s62, %s63
      %p74 = scmp.eq.s32.totalorder %s14, 0
      %p75 = por %p73, %p74
      %p76 = scmp.ne.s32.totalorder %s62, %s63
      %p77 = scmp.eq.s32.totalorder %s15, 3
      %p78 = por %p76, %p77
      %p80 = scmp.ne.s32.totalorder %s63, %s79
      %p81 = scmp.eq.s32.totalorder %s15, 0
      %p82 = por %p80, %p81
      %s84 = sadd.s32 %s83, 1
      %p87 = scmp.eq.s32.totalorder %s9, 3
      %p88 = scmp.ne.s32.totalorder %s83, %s85
      %p89 = scmp.eq.s32.totalorder %s9, 0
      %p90 = por %p88, %p89
      %p91 = scmp.ne.s32.totalorder %s83, %s85
      %p92 = scmp.eq.s32.totalorder %s14, 3
      %p93 = por %p91, %p92
      %p94 = scmp.ne.s32.totalorder %s85, %s86
      %p95 = scmp.eq.s32.totalorder %s14, 0
      %p96 = por %p94, %p95
      %p97 = scmp.ne.s32.totalorder %s85, %s86
      %p98 = scmp.eq.s32.totalorder %s15, 3
      %p99 = por %p97, %p98
      %p101 = scmp.ne.s32.totalorder %s86, %s100
      %p102 = scmp.eq.s32.totalorder %s15, 0
      %p103 = por %p101, %p102
      %s104 = ssub.s32 %s16, %s28
      %p105 = scmp.eq.s32.totalorder %s104, 0
      %s107 = sadd.s32 %s106, 1
      %s108 = scalar_select %p105, %s106, %s107
      %p111 = pneg %p105
      %p112 = scmp.eq.s32.totalorder %s9, 3
      %p113 = por %p111, %p112
      %p114 = scmp.ne.s32.totalorder %s106, %s109
      %p115 = scmp.eq.s32.totalorder %s9, 0
      %p116 = por %p114, %p115
      %p117 = scmp.ne.s32.totalorder %s106, %s109
      %p118 = scmp.eq.s32.totalorder %s14, 3
      %p119 = por %p117, %p118
      %p120 = scmp.ne.s32.totalorder %s109, %s110
      %p121 = scmp.eq.s32.totalorder %s14, 0
      %p122 = por %p120, %p121
      %p123 = scmp.ne.s32.totalorder %s109, %s110
      %p124 = scmp.eq.s32.totalorder %s15, 3
      %p125 = por %p123, %p124
      %p127 = scmp.ne.s32.totalorder %s110, %s126
      %p128 = scmp.eq.s32.totalorder %s15, 0
      %p129 = por %p127, %p128
      %p130 = scmp.le.s32.totalorder 1, %s9
      %p131 = scmp.lt.s32.totalorder %s9, 5
      %p132 = pnand %p130, %p131
      %p133 = pneg %p132
      // Predicated region
      $region9: #{gcn_forward.7} parent=5 // pred_check
        _
      $region10: #{gcn_forward.7} parent=5 // pred_check_branch
        %135 = sbr.rel (%p132) target = $region12
      $region11: #{gcn_forward.7} parent=5 // pred_region
        %s136 = ssub.s32 %s9, 1
        // Predicated region
        $region13: #{gcn_forward.7} parent=11 // pred_check
          %p137 = pneg %p96
        $region14: #{gcn_forward.7} parent=11 // pred_check_branch
          %139 = sbr.rel (%p137) target = $region16
        $region15: #{gcn_forward.7} parent=11 // pred_region
          _
        $region16: #{gcn_forward.7} parent=11 // pred_fallthru
          _
      $region12: #{gcn_forward.7} parent=5 // pred_fallthru
        _
      %p140 = scmp.lt.s32.totalorder %s9, 4
      // Predicated region
      $region17: #{gcn_forward.7} parent=5 // pred_check
        %p141 = pneg %p140
      $region18: #{gcn_forward.7} parent=5 // pred_check_branch
        %143 = sbr.rel (%p141) target = $region20
      $region19: #{gcn_forward.7} parent=5 // pred_region
        // Predicated region
        $region21: #{gcn_forward.7} parent=19 // pred_check
          %p144 = pneg %p43
        $region22: #{gcn_forward.7} parent=19 // pred_check_branch
          %146 = sbr.rel (%p144) target = $region24
        $region23: #{gcn_forward.7} parent=19 // pred_region
          %s147 = sand.u32 %s33, 1
          %s148 = sand.u32 %s33, 1
          %s149 = smul.addr %s148, 64
          %s150 = scalar_lea.vmem [#allocation3], %s149
          %s151 = smul.u32 16, %s16
          %s152 = smul.addr %s151, 2
          %s153 = sadd.s32 %s17, %s152
          %s154 = smul.addr %s153, 4
          %s155 = scalar_lea.vmem %s0, %s154
          // Predicated region
          $region25: #{gcn_forward.7} parent=23 // pred_check
            _
          $region26: #{gcn_forward.7} parent=23 // pred_check_branch
            %157 = sbr.rel (0) target = $region28
          $region27: #{gcn_forward.7} parent=23 // pred_region
            // Predicated region
            $region29: #{gcn_forward.7} parent=27 // pred_check
              _
            $region30: #{gcn_forward.7} parent=27 // pred_check_branch
              %159 = sbr.rel target = $region32
            $region31: #{gcn_forward.7} parent=27 // pred_region
              // Predicated region
              $region44: #{gcn_forward.7} parent=31 // pred_check
                _
              $region45: #{gcn_forward.7} parent=31 // pred_check_branch
                %204 = sbr.rel (0) target = $region47
              $region46: #{gcn_forward.7} parent=31 // pred_region
                loop: start=0, step=1, limit=1
                $region48: #{gcn_forward.7} parent=46 // loop_pre_header
                  _
                $region49: #{gcn_forward.7} parent=46 // loop_header
                  %s206 = sphi 0, %s210
                  %p207 = scmp.ge.s32.totalorder %s206, 1
                  %s211 = sphi %s155, %s155
                  %s212 = sphi %s150, %s150
                $region50: #{gcn_forward.7} parent=46 // loop_header_branch
                  %209 = sbr.rel (%p207) target = $region54
                $region51: #{gcn_forward.7} parent=46 // loop_body
                  _
                $region52: #{gcn_forward.7} parent=46 // loop_footer
                  %s210 = sadd.s32 1, %s206
                $region53: #{gcn_forward.7} parent=46 // loop_footer_branch
                  %205 = sbr.rel target = $region49
                $region54: #{gcn_forward.7} parent=46 // loop_exit
                  _
                loop: start=0, step=1, limit=1
                $region55: #{gcn_forward.7} parent=46 // loop_pre_header
                  _
                $region56: #{gcn_forward.7} parent=46 // loop_header
                  %s215 = sphi 0, %s219
                  %p216 = scmp.ge.s32.totalorder %s215, 1
                  %s220 = sphi %s155, %s155
                  %s221 = sphi %s150, %s150
                $region57: #{gcn_forward.7} parent=46 // loop_header_branch
                  %218 = sbr.rel (%p216) target = $region61
                $region58: #{gcn_forward.7} parent=46 // loop_body
                  %v222 = vld [vmem:[%s220] sm:$0xf]
                  %223 = vst [vmem:[%s221] sm:$0xf] %v222
                  %v224 = vld [vmem:[%s220 + $0x8] sm:$0xf]
                  %225 = vst [vmem:[%s221 + $0x4] sm:$0xf] %v224
                  %v226 = vld [vmem:[%s220 + $0x10] sm:$0xf]
                  %227 = vst [vmem:[%s221 + $0x8] sm:$0xf] %v226
                  %v228 = vld [vmem:[%s220 + $0x18] sm:$0xf]
                  %229 = vst [vmem:[%s221 + $0xc] sm:$0xf] %v228
                  %v230 = vld [vmem:[%s220 + $0x20] sm:$0xf]
                  %231 = vst [vmem:[%s221 + $0x10] sm:$0xf] %v230
                  %v232 = vld [vmem:[%s220 + $0x28] sm:$0xf]
                  %233 = vst [vmem:[%s221 + $0x14] sm:$0xf] %v232
                  %v234 = vld [vmem:[%s220 + $0x30] sm:$0xf]
                  %235 = vst [vmem:[%s221 + $0x18] sm:$0xf] %v234
                  %v236 = vld [vmem:[%s220 + $0x38] sm:$0xf]
                  %237 = vst [vmem:[%s221 + $0x1c] sm:$0xf] %v236
                  %v238 = vld [vmem:[%s220 + $0x40] sm:$0xf]
                  %239 = vst [vmem:[%s221 + $0x20] sm:$0xf] %v238
                  %v240 = vld [vmem:[%s220 + $0x48] sm:$0xf]
                  %241 = vst [vmem:[%s221 + $0x24] sm:$0xf] %v240
                  %v242 = vld [vmem:[%s220 + $0x50] sm:$0xf]
                  %243 = vst [vmem:[%s221 + $0x28] sm:$0xf] %v242
                  %v244 = vld [vmem:[%s220 + $0x58] sm:$0xf]
                  %245 = vst [vmem:[%s221 + $0x2c] sm:$0xf] %v244
                  %v246 = vld [vmem:[%s220 + $0x60] sm:$0xf]
                  %247 = vst [vmem:[%s221 + $0x30] sm:$0xf] %v246
                  %v248 = vld [vmem:[%s220 + $0x68] sm:$0xf]
                  %249 = vst [vmem:[%s221 + $0x34] sm:$0xf] %v248
                  %v250 = vld [vmem:[%s220 + $0x70] sm:$0xf]
                  %251 = vst [vmem:[%s221 + $0x38] sm:$0xf] %v250
                  %v252 = vld [vmem:[%s220 + $0x78] sm:$0xf]
                  %253 = vst [vmem:[%s221 + $0x3c] sm:$0xf] %v252
                $region59: #{gcn_forward.7} parent=46 // loop_footer
                  %s219 = sadd.s32 1, %s215
                $region60: #{gcn_forward.7} parent=46 // loop_footer_branch
                  %214 = sbr.rel target = $region56
                $region61: #{gcn_forward.7} parent=46 // loop_exit
                  _
              $region47: #{gcn_forward.7} parent=31 // pred_fallthru
                _
            $region32: #{gcn_forward.7} parent=27 // pred_fallthru
              _
            // Predicated region
            $region33: #{gcn_forward.7} parent=27 // pred_check
              _
            $region34: #{gcn_forward.7} parent=27 // pred_check_branch
              %161 = sbr.rel (0) target = $region36
            $region35: #{gcn_forward.7} parent=27 // pred_region
              loop: start=0, step=1, limit=1
              $region37: #{gcn_forward.7} parent=35 // loop_pre_header
                _
              $region38: #{gcn_forward.7} parent=35 // loop_header
                %s164 = sphi 0, %s168
                %p165 = scmp.ge.s32.totalorder %s164, 1
                %s169 = sphi %s155, %s155
                %s170 = sphi %s150, %s150
              $region39: #{gcn_forward.7} parent=35 // loop_header_branch
                %167 = sbr.rel (%p165) target = $region43
              $region40: #{gcn_forward.7} parent=35 // loop_body
                %v171 = vld [vmem:[%s169] sm:$0xf]
                %172 = vst [vmem:[%s170] sm:$0xf] %v171
                %v173 = vld [vmem:[%s169 + $0x8] sm:$0xf]
                %174 = vst [vmem:[%s170 + $0x4] sm:$0xf] %v173
                %v175 = vld [vmem:[%s169 + $0x10] sm:$0xf]
                %176 = vst [vmem:[%s170 + $0x8] sm:$0xf] %v175
                %v177 = vld [vmem:[%s169 + $0x18] sm:$0xf]
                %178 = vst [vmem:[%s170 + $0xc] sm:$0xf] %v177
                %v179 = vld [vmem:[%s169 + $0x20] sm:$0xf]
                %180 = vst [vmem:[%s170 + $0x10] sm:$0xf] %v179
                %v181 = vld [vmem:[%s169 + $0x28] sm:$0xf]
                %182 = vst [vmem:[%s170 + $0x14] sm:$0xf] %v181
                %v183 = vld [vmem:[%s169 + $0x30] sm:$0xf]
                %184 = vst [vmem:[%s170 + $0x18] sm:$0xf] %v183
                %v185 = vld [vmem:[%s169 + $0x38] sm:$0xf]
                %186 = vst [vmem:[%s170 + $0x1c] sm:$0xf] %v185
                %v187 = vld [vmem:[%s169 + $0x40] sm:$0xf]
                %188 = vst [vmem:[%s170 + $0x20] sm:$0xf] %v187
                %v189 = vld [vmem:[%s169 + $0x48] sm:$0xf]
                %190 = vst [vmem:[%s170 + $0x24] sm:$0xf] %v189
                %v191 = vld [vmem:[%s169 + $0x50] sm:$0xf]
                %192 = vst [vmem:[%s170 + $0x28] sm:$0xf] %v191
                %v193 = vld [vmem:[%s169 + $0x58] sm:$0xf]
                %194 = vst [vmem:[%s170 + $0x2c] sm:$0xf] %v193
                %v195 = vld [vmem:[%s169 + $0x60] sm:$0xf]
                %196 = vst [vmem:[%s170 + $0x30] sm:$0xf] %v195
                %v197 = vld [vmem:[%s169 + $0x68] sm:$0xf]
                %198 = vst [vmem:[%s170 + $0x34] sm:$0xf] %v197
                %v199 = vld [vmem:[%s169 + $0x70] sm:$0xf]
                %200 = vst [vmem:[%s170 + $0x38] sm:$0xf] %v199
                %v201 = vld [vmem:[%s169 + $0x78] sm:$0xf]
                %202 = vst [vmem:[%s170 + $0x3c] sm:$0xf] %v201
              $region41: #{gcn_forward.7} parent=35 // loop_footer
                %s168 = sadd.s32 1, %s164
              $region42: #{gcn_forward.7} parent=35 // loop_footer_branch
                %163 = sbr.rel target = $region38
              $region43: #{gcn_forward.7} parent=35 // loop_exit
                _
            $region36: #{gcn_forward.7} parent=27 // pred_fallthru
              _
          $region28: #{gcn_forward.7} parent=23 // pred_fallthru
            _
          %254 = vnop
        $region24: #{gcn_forward.7} parent=19 // pred_fallthru
          _
        // Predicated region
        $region62: #{gcn_forward.7} parent=19 // pred_check
          %p255 = pneg %p69
        $region63: #{gcn_forward.7} parent=19 // pred_check_branch
          %257 = sbr.rel (%p255) target = $region65
        $region64: #{gcn_forward.7} parent=19 // pred_region
          %s258 = smul.u32 16, %s17
          %p259 = scmp.lt.s32.totalorder %s258, 31
          %s260 = scalar_select %p259, %s258, 31
          %s261 = smul.addr %s260, 4
          %s262 = scalar_lea.vmem %s1, %s261
          %s263 = smul.u32 16, %s17
        $region65: #{gcn_forward.7} parent=19 // pred_fallthru
          _
      $region20: #{gcn_forward.7} parent=5 // pred_fallthru
        _
      %p264 = scmp.le.s32.totalorder 1, %s9
      %p265 = scmp.lt.s32.totalorder %s9, 5
      %p266 = pnand %p264, %p265
      %p267 = pneg %p266
      // Predicated region
      $region66: #{gcn_forward.7} parent=5 // pred_check
        _
      $region67: #{gcn_forward.7} parent=5 // pred_check_branch
        %269 = sbr.rel (%p266) target = $region69
      $region68: #{gcn_forward.7} parent=5 // pred_region
        %s270 = ssub.s32 %s9, 1
        %s271 = sand.u32 %s36, 1
        %s272 = sand.u32 %s36, 1
        %s273 = smul.addr %s272, 64
        %s274 = scalar_lea.vmem [#allocation3], %s273
        // Predicated region
        $region70: #{gcn_forward.7} parent=68 // pred_check
          %p275 = pneg %p49
        $region71: #{gcn_forward.7} parent=68 // pred_check_branch
          %277 = sbr.rel (%p275) target = $region73
        $region72: #{gcn_forward.7} parent=68 // pred_region
          _
        $region73: #{gcn_forward.7} parent=68 // pred_fallthru
          _
        %s278 = sand.u32 %s36, 1
        %s279 = sand.u32 %s36, 1
        %s280 = smul.addr %s279, 64
        %s281 = scalar_lea.vmem [#allocation3], %s280
        %p282 = pneg %p49
        %p283 = pneg %p46
        %s284 = smul.u32 16, %s19
        %p285 = scmp.lt.s32.totalorder %s284, 31
        %s286 = scalar_select %p285, %s284, 31
        %s287 = smul.addr %s286, 4
        %s288 = scalar_lea.vmem %s1, %s287
        %p289 = pneg %p75
        %p290 = pneg %p72
        %p291 = pneg %p96
        %p292 = pneg %p93
        %p293 = pneg %p122
        %p294 = pneg %p119
        %s295 = smul.u32 16, %s18
        %p296 = scmp.lt.s32.totalorder %s295, 31
        %s297 = scalar_select %p296, %s295, 31
        %s298 = smul.addr %s297, 8
        %s299 = scalar_lea.vmem %s3, %s298
        %s300 = smul.u32 16, %s18
        %s301 = smul.u32 16, %s19
        %p302 = scmp.lt.s32.totalorder %s301, 31
        %s303 = scalar_select %p302, %s301, 31
        %s304 = smul.addr %s303, 4
        %s305 = scalar_lea.vmem %s1, %s304
        %s306 = smul.u32 16, %s19
        %s307 = smul.u32 16, %s18
        %p308 = scmp.lt.s32.totalorder %s307, 31
        %s309 = scalar_select %p308, %s307, 31
        %s310 = smul.addr %s309, 8
        %s311 = scalar_lea.vmem %s3, %s310
        %s312 = smul.u32 16, %s18
        %p314 = scmp.eq.s32.totalorder %s19, 0
        // Predicated region
        $region74: #{gcn_forward.7} parent=68 // pred_check
          %p315 = pneg %p314
        $region75: #{gcn_forward.7} parent=68 // pred_check_branch
          %317 = sbr.rel (%p315) target = $region77
        $region76: #{gcn_forward.7} parent=68 // pred_region
          %318 = vst [vmem:[#allocation2] sm:$0xff] 0.0
          %319 = vst [vmem:[#allocation2 + $0x8] sm:$0xff] 0.0
          %320 = vst [vmem:[#allocation2 + $0x10] sm:$0xff] 0.0
          %321 = vst [vmem:[#allocation2 + $0x18] sm:$0xff] 0.0
          %322 = vst [vmem:[#allocation2 + $0x20] sm:$0xff] 0.0
          %323 = vst [vmem:[#allocation2 + $0x28] sm:$0xff] 0.0
          %324 = vst [vmem:[#allocation2 + $0x30] sm:$0xff] 0.0
          %325 = vst [vmem:[#allocation2 + $0x38] sm:$0xff] 0.0
          %326 = vst [vmem:[#allocation2 + $0x40] sm:$0xff] 0.0
          %327 = vst [vmem:[#allocation2 + $0x48] sm:$0xff] 0.0
          %328 = vst [vmem:[#allocation2 + $0x50] sm:$0xff] 0.0
          %329 = vst [vmem:[#allocation2 + $0x58] sm:$0xff] 0.0
          %330 = vst [vmem:[#allocation2 + $0x60] sm:$0xff] 0.0
          %331 = vst [vmem:[#allocation2 + $0x68] sm:$0xff] 0.0
          %332 = vst [vmem:[#allocation2 + $0x70] sm:$0xff] 0.0
          %333 = vst [vmem:[#allocation2 + $0x78] sm:$0xff] 0.0
        $region77: #{gcn_forward.7} parent=68 // pred_fallthru
          _
        %v334 = vld [vmem:[#allocation2] sm:$0xff]
        %v335 = vld [vmem:[#allocation2 + $0x8] sm:$0xff]
        %v336 = vld [vmem:[#allocation2 + $0x10] sm:$0xff]
        %v337 = vld [vmem:[#allocation2 + $0x18] sm:$0xff]
        %v338 = vld [vmem:[#allocation2 + $0x20] sm:$0xff]
        %v339 = vld [vmem:[#allocation2 + $0x28] sm:$0xff]
        %v340 = vld [vmem:[#allocation2 + $0x30] sm:$0xff]
        %v341 = vld [vmem:[#allocation2 + $0x38] sm:$0xff]
        %v342 = vld [vmem:[#allocation2 + $0x40] sm:$0xff]
        %v343 = vld [vmem:[#allocation2 + $0x48] sm:$0xff]
        %v344 = vld [vmem:[#allocation2 + $0x50] sm:$0xff]
        %v345 = vld [vmem:[#allocation2 + $0x58] sm:$0xff]
        %v346 = vld [vmem:[#allocation2 + $0x60] sm:$0xff]
        %v347 = vld [vmem:[#allocation2 + $0x68] sm:$0xff]
        %v348 = vld [vmem:[#allocation2 + $0x70] sm:$0xff]
        %v349 = vld [vmem:[#allocation2 + $0x78] sm:$0xff]
        %v350 = vld [vmem:[%s274] sm:$0xf]
        %v351 = vld [vmem:[%s274 + $0x4] sm:$0xf]
        %v352 = vld [vmem:[%s274 + $0x8] sm:$0xf]
        %v353 = vld [vmem:[%s274 + $0xc] sm:$0xf]
        %v354 = vld [vmem:[%s274 + $0x10] sm:$0xf]
        %v355 = vld [vmem:[%s274 + $0x14] sm:$0xf]
        %v356 = vld [vmem:[%s274 + $0x18] sm:$0xf]
        %v357 = vld [vmem:[%s274 + $0x1c] sm:$0xf]
        %v358 = vld [vmem:[%s274 + $0x20] sm:$0xf]
        %v359 = vld [vmem:[%s274 + $0x24] sm:$0xf]
        %v360 = vld [vmem:[%s274 + $0x28] sm:$0xf]
        %v361 = vld [vmem:[%s274 + $0x2c] sm:$0xf]
        %v362 = vld [vmem:[%s274 + $0x30] sm:$0xf]
        %v363 = vld [vmem:[%s274 + $0x34] sm:$0xf]
        %v364 = vld [vmem:[%s274 + $0x38] sm:$0xf]
        %v365 = vld [vmem:[%s274 + $0x3c] sm:$0xf]
        %v366 = vld [vmem:[%s305] sm:$0xf]
        %v367 = vld [vmem:[%s305 + $0x4] sm:$0xf]
        %v368 = vld [vmem:[%s305 + $0x8] sm:$0xf]
        %v369 = vld [vmem:[%s305 + $0xc] sm:$0xf]
        %v370 = vld [vmem:[%s305 + $0x10] sm:$0xf]
        %v371 = vld [vmem:[%s305 + $0x14] sm:$0xf]
        %v372 = vld [vmem:[%s305 + $0x18] sm:$0xf]
        %v373 = vld [vmem:[%s305 + $0x1c] sm:$0xf]
        %v374 = vld [vmem:[%s305 + $0x20] sm:$0xf]
        %v375 = vld [vmem:[%s305 + $0x24] sm:$0xf]
        %v376 = vld [vmem:[%s305 + $0x28] sm:$0xf]
        %v377 = vld [vmem:[%s305 + $0x2c] sm:$0xf]
        %v378 = vld [vmem:[%s305 + $0x30] sm:$0xf]
        %v379 = vld [vmem:[%s305 + $0x34] sm:$0xf]
        %v380 = vld [vmem:[%s305 + $0x38] sm:$0xf]
        %v381 = vld [vmem:[%s305 + $0x3c] sm:$0xf]
        %v398 = vunpack.c.l.b16 %v350
        %v399 = vunpack.c.l.b16 %v351
        %v400 = vunpack.c.l.b16 %v352
        %v401 = vunpack.c.l.b16 %v353
        %v402 = vunpack.c.l.b16 %v354
        %v403 = vunpack.c.l.b16 %v355
        %v404 = vunpack.c.l.b16 %v356
        %v405 = vunpack.c.l.b16 %v357
        %v406 = vunpack.c.l.b16 %v358
        %v407 = vunpack.c.l.b16 %v359
        %v408 = vunpack.c.l.b16 %v360
        %v409 = vunpack.c.l.b16 %v361
        %v410 = vunpack.c.l.b16 %v362
        %v411 = vunpack.c.l.b16 %v363
        %v412 = vunpack.c.l.b16 %v364
        %v413 = vunpack.c.l.b16 %v365
        %v414 = vpack.c.b16 %v399, %v398
        %v415 = vpack.c.b16 %v401, %v400
        %v416 = vpack.c.b16 %v403, %v402
        %v417 = vpack.c.b16 %v405, %v404
        %v418 = vpack.c.b16 %v407, %v406
        %v419 = vpack.c.b16 %v409, %v408
        %v420 = vpack.c.b16 %v411, %v410
        %v421 = vpack.c.b16 %v413, %v412
        %v446 = vunpack.c.l.b16 %v366
        %v447 = vunpack.c.l.b16 %v367
        %v448 = vunpack.c.l.b16 %v368
        %v449 = vunpack.c.l.b16 %v369
        %v450 = vunpack.c.l.b16 %v370
        %v451 = vunpack.c.l.b16 %v371
        %v452 = vunpack.c.l.b16 %v372
        %v453 = vunpack.c.l.b16 %v373
        %v454 = vunpack.c.l.b16 %v374
        %v455 = vunpack.c.l.b16 %v375
        %v456 = vunpack.c.l.b16 %v376
        %v457 = vunpack.c.l.b16 %v377
        %v458 = vunpack.c.l.b16 %v378
        %v459 = vunpack.c.l.b16 %v379
        %v460 = vunpack.c.l.b16 %v380
        %v461 = vunpack.c.l.b16 %v381
        %v462 = vpack.c.b16 %v447, %v446
        %v463 = vpack.c.b16 %v449, %v448
        %v464 = vpack.c.b16 %v451, %v450
        %v465 = vpack.c.b16 %v453, %v452
        %v466 = vpack.c.b16 %v455, %v454
        %v467 = vpack.c.b16 %v457, %v456
        %v468 = vpack.c.b16 %v459, %v458
        %v469 = vpack.c.b16 %v461, %v460
        %478 = vmatprep.subr.bf16.mxu0 0
        %479 = vmatpush1.bf16.msra.mxu0 %v462
        %480 = vmatprep.subr.bf16.mxu0 0
        %481 = vmatpush1.bf16.msra.mxu0 %v463
        %482 = vmatprep.subr.bf16.mxu0 0
        %483 = vmatpush1.bf16.msra.mxu0 %v464
        %484 = vmatprep.subr.bf16.mxu0 0
        %485 = vmatpush1.bf16.msra.mxu0 %v465
        %486 = vmatprep.subr.bf16.mxu0 0
        %487 = vmatpush1.bf16.msra.mxu0 %v466
        %488 = vmatprep.subr.bf16.mxu0 0
        %489 = vmatpush1.bf16.msra.mxu0 %v467
        %490 = vmatprep.subr.bf16.mxu0 0
        %491 = vmatpush1.bf16.msra.mxu0 %v468
        %492 = vmatprep.subr.bf16.mxu0 0
        %493 = vmatpush1.bf16.msra.mxu0 %v469
        %494 = vmatprep.subr.bf16.mxu0 0
        %495 = vmatpush1.bf16.msra.mxu0 0
        %496 = vmatprep.subr.bf16.mxu0 0
        %497 = vmatpush1.bf16.msra.mxu0 0
        %498 = vmatprep.subr.bf16.mxu0 0
        %499 = vmatpush1.bf16.msra.mxu0 0
        %500 = vmatprep.subr.bf16.mxu0 0
        %501 = vmatpush1.bf16.msra.mxu0 0
        %502 = vmatprep.subr.bf16.mxu0 0
        %503 = vmatpush1.bf16.msra.mxu0 0
        %504 = vmatprep.subr.bf16.mxu0 0
        %505 = vmatpush1.bf16.msra.mxu0 0
        %506 = vmatprep.subr.bf16.mxu0 0
        %507 = vmatpush1.bf16.msra.mxu0 0
        %508 = vmatprep.subr.bf16.mxu0 0
        %509 = vmatpush1.bf16.msra.mxu0 0
        %510 = vmatprep.mubr.bf16.mxu0 0
        %511 = vmatmul.mubr.bf16.gmra.mrb[0].mxu0 %v414
        %v512 = vpop.f32.mrb[0].mxu0
        %v513 = vadd.f32 0.0, %v512
        %v514 = vpop.f32.mrb[0].mxu0
        %v515 = vpop.f32.mrb[0].mxu0
        %v516 = vadd.f32 0.0, %v515
        %v517 = vpop.f32.mrb[0].mxu0
        %518 = vmatprep.mubr.bf16.mxu0 0
        %519 = vmatmul.mubr.bf16.gmra.mrb[0].mxu0 %v415
        %v520 = vpop.f32.mrb[0].mxu0
        %v521 = vadd.f32 0.0, %v520
        %v522 = vpop.f32.mrb[0].mxu0
        %v523 = vpop.f32.mrb[0].mxu0
        %v524 = vadd.f32 0.0, %v523
        %v525 = vpop.f32.mrb[0].mxu0
        %526 = vmatprep.mubr.bf16.mxu0 0
        %527 = vmatmul.mubr.bf16.gmra.mrb[0].mxu0 %v416
        %v528 = vpop.f32.mrb[0].mxu0
        %v529 = vadd.f32 0.0, %v528
        %v530 = vpop.f32.mrb[0].mxu0
        %v531 = vpop.f32.mrb[0].mxu0
        %v532 = vadd.f32 0.0, %v531
        %v533 = vpop.f32.mrb[0].mxu0
        %534 = vmatprep.mubr.bf16.mxu0 0
        %535 = vmatmul.mubr.bf16.gmra.mrb[0].mxu0 %v417
        %v536 = vpop.f32.mrb[0].mxu0
        %v537 = vadd.f32 0.0, %v536
        %v538 = vpop.f32.mrb[0].mxu0
        %v539 = vpop.f32.mrb[0].mxu0
        %v540 = vadd.f32 0.0, %v539
        %v541 = vpop.f32.mrb[0].mxu0
        %542 = vmatprep.mubr.bf16.mxu0 0
        %543 = vmatmul.mubr.bf16.gmra.mrb[0].mxu0 %v418
        %v544 = vpop.f32.mrb[0].mxu0
        %v545 = vadd.f32 0.0, %v544
        %v546 = vpop.f32.mrb[0].mxu0
        %v547 = vpop.f32.mrb[0].mxu0
        %v548 = vadd.f32 0.0, %v547
        %v549 = vpop.f32.mrb[0].mxu0
        %550 = vmatprep.mubr.bf16.mxu0 0
        %551 = vmatmul.mubr.bf16.gmra.mrb[0].mxu0 %v419
        %v552 = vpop.f32.mrb[0].mxu0
        %v553 = vadd.f32 0.0, %v552
        %v554 = vpop.f32.mrb[0].mxu0
        %v555 = vpop.f32.mrb[0].mxu0
        %v556 = vadd.f32 0.0, %v555
        %v557 = vpop.f32.mrb[0].mxu0
        %558 = vmatprep.mubr.bf16.mxu0 0
        %559 = vmatmul.mubr.bf16.gmra.mrb[0].mxu0 %v420
        %v560 = vpop.f32.mrb[0].mxu0
        %v561 = vadd.f32 0.0, %v560
        %v562 = vpop.f32.mrb[0].mxu0
        %v563 = vpop.f32.mrb[0].mxu0
        %v564 = vadd.f32 0.0, %v563
        %v565 = vpop.f32.mrb[0].mxu0
        %566 = vmatprep.mubr.bf16.mxu0 0
        %567 = vmatmul.mubr.bf16.gmra.mrb[0].mxu0 %v421
        %v568 = vpop.f32.mrb[0].mxu0
        %v569 = vadd.f32 0.0, %v568
        %v570 = vpop.f32.mrb[0].mxu0
        %v571 = vpop.f32.mrb[0].mxu0
        %v572 = vadd.f32 0.0, %v571
        %v573 = vpop.f32.mrb[0].mxu0
        %574 = vdwg.mxu0
        %v575 = vadd.f32 %v334, %v513
        %v576 = vadd.f32 %v335, %v516
        %v577 = vadd.f32 %v336, %v521
        %v578 = vadd.f32 %v337, %v524
        %v579 = vadd.f32 %v338, %v529
        %v580 = vadd.f32 %v339, %v532
        %v581 = vadd.f32 %v340, %v537
        %v582 = vadd.f32 %v341, %v540
        %v583 = vadd.f32 %v342, %v545
        %v584 = vadd.f32 %v343, %v548
        %v585 = vadd.f32 %v344, %v553
        %v586 = vadd.f32 %v345, %v556
        %v587 = vadd.f32 %v346, %v561
        %v588 = vadd.f32 %v347, %v564
        %v589 = vadd.f32 %v348, %v569
        %v590 = vadd.f32 %v349, %v572
        %591 = vst [vmem:[#allocation2] sm:$0xff] %v575
        %592 = vst [vmem:[#allocation2 + $0x8] sm:$0xff] %v576
        %593 = vst [vmem:[#allocation2 + $0x10] sm:$0xff] %v577
        %594 = vst [vmem:[#allocation2 + $0x18] sm:$0xff] %v578
        %595 = vst [vmem:[#allocation2 + $0x20] sm:$0xff] %v579
        %596 = vst [vmem:[#allocation2 + $0x28] sm:$0xff] %v580
        %597 = vst [vmem:[#allocation2 + $0x30] sm:$0xff] %v581
        %598 = vst [vmem:[#allocation2 + $0x38] sm:$0xff] %v582
        %599 = vst [vmem:[#allocation2 + $0x40] sm:$0xff] %v583
        %600 = vst [vmem:[#allocation2 + $0x48] sm:$0xff] %v584
        %601 = vst [vmem:[#allocation2 + $0x50] sm:$0xff] %v585
        %602 = vst [vmem:[#allocation2 + $0x58] sm:$0xff] %v586
        %603 = vst [vmem:[#allocation2 + $0x60] sm:$0xff] %v587
        %604 = vst [vmem:[#allocation2 + $0x68] sm:$0xff] %v588
        %605 = vst [vmem:[#allocation2 + $0x70] sm:$0xff] %v589
        %606 = vst [vmem:[#allocation2 + $0x78] sm:$0xff] %v590
        %p607 = scmp.eq.s32.totalorder %s19, 1
        // Predicated region
        $region78: #{gcn_forward.7} parent=68 // pred_check
          %p608 = pneg %p607
        $region79: #{gcn_forward.7} parent=68 // pred_check_branch
          %610 = sbr.rel (%p608) target = $region81
        $region80: #{gcn_forward.7} parent=68 // pred_region
          %v611 = vld [vmem:[#allocation2] sm:$0xff]
          %v612 = vld [vmem:[#allocation2 + $0x8] sm:$0xff]
          %v613 = vld [vmem:[#allocation2 + $0x10] sm:$0xff]
          %v614 = vld [vmem:[#allocation2 + $0x18] sm:$0xff]
          %v615 = vld [vmem:[#allocation2 + $0x20] sm:$0xff]
          %v616 = vld [vmem:[#allocation2 + $0x28] sm:$0xff]
          %v617 = vld [vmem:[#allocation2 + $0x30] sm:$0xff]
          %v618 = vld [vmem:[#allocation2 + $0x38] sm:$0xff]
          %v619 = vld [vmem:[#allocation2 + $0x40] sm:$0xff]
          %v620 = vld [vmem:[#allocation2 + $0x48] sm:$0xff]
          %v621 = vld [vmem:[#allocation2 + $0x50] sm:$0xff]
          %v622 = vld [vmem:[#allocation2 + $0x58] sm:$0xff]
          %v623 = vld [vmem:[#allocation2 + $0x60] sm:$0xff]
          %v624 = vld [vmem:[#allocation2 + $0x68] sm:$0xff]
          %v625 = vld [vmem:[#allocation2 + $0x70] sm:$0xff]
          %v626 = vld [vmem:[#allocation2 + $0x78] sm:$0xff]
          %v627 = vld [vmem:[%s2] sm:$0x1]
          %v629 = vlaneseq
          %v630 = vshrl.u32 %v629, 7
          %v631 = vsub.s32 0, %v630
          %v632 = vrot.slane %v627, %v631
          %v634 = vadd.f32 %v611, %v632
          %v635 = vadd.f32 %v612, %v632
          %v636 = vadd.f32 %v613, %v632
          %v637 = vadd.f32 %v614, %v632
          %v638 = vadd.f32 %v615, %v632
          %v639 = vadd.f32 %v616, %v632
          %v640 = vadd.f32 %v617, %v632
          %v641 = vadd.f32 %v618, %v632
          %v642 = vadd.f32 %v619, %v632
          %v643 = vadd.f32 %v620, %v632
          %v644 = vadd.f32 %v621, %v632
          %v645 = vadd.f32 %v622, %v632
          %v646 = vadd.f32 %v623, %v632
          %v647 = vadd.f32 %v624, %v632
          %v648 = vadd.f32 %v625, %v632
          %v649 = vadd.f32 %v626, %v632
          %v650 = vlaneseq
          %v651 = vand.u32 %v650, 127
          %vm652 = vcmp.lt.s32.totalorder %v651, 8
          %v653 = vsel %vm652, %v634, -inf
          %v654 = vsel %vm652, %v635, -inf
          %v655 = vsel %vm652, %v636, -inf
          %v656 = vsel %vm652, %v637, -inf
          %v657 = vsel %vm652, %v638, -inf
          %v658 = vsel %vm652, %v639, -inf
          %v659 = vsel %vm652, %v640, -inf
          %v660 = vsel %vm652, %v641, -inf
          %v661 = vsel %vm652, %v642, -inf
          %v662 = vsel %vm652, %v643, -inf
          %v663 = vsel %vm652, %v644, -inf
          %v664 = vsel %vm652, %v645, -inf
          %v665 = vsel %vm652, %v646, -inf
          %v666 = vsel %vm652, %v647, -inf
          %v667 = vsel %vm652, %v648, -inf
          %v668 = vsel %vm652, %v649, -inf
          %669 = vmax.xlane.f32.xlu0 %v653
          %v670 = vpop.xlane.xlu0 %669
          %671 = vmax.xlane.f32.xlu0 %v654
          %v672 = vpop.xlane.xlu0 %671
          %673 = vmax.xlane.f32.xlu0 %v655
          %v674 = vpop.xlane.xlu0 %673
          %675 = vmax.xlane.f32.xlu0 %v656
          %v676 = vpop.xlane.xlu0 %675
          %677 = vmax.xlane.f32.xlu0 %v657
          %v678 = vpop.xlane.xlu0 %677
          %679 = vmax.xlane.f32.xlu0 %v658
          %v680 = vpop.xlane.xlu0 %679
          %681 = vmax.xlane.f32.xlu0 %v659
          %v682 = vpop.xlane.xlu0 %681
          %683 = vmax.xlane.f32.xlu0 %v660
          %v684 = vpop.xlane.xlu0 %683
          %685 = vmax.xlane.f32.xlu0 %v661
          %v686 = vpop.xlane.xlu0 %685
          %687 = vmax.xlane.f32.xlu0 %v662
          %v688 = vpop.xlane.xlu0 %687
          %689 = vmax.xlane.f32.xlu0 %v663
          %v690 = vpop.xlane.xlu0 %689
          %691 = vmax.xlane.f32.xlu0 %v664
          %v692 = vpop.xlane.xlu0 %691
          %693 = vmax.xlane.f32.xlu0 %v665
          %v694 = vpop.xlane.xlu0 %693
          %695 = vmax.xlane.f32.xlu0 %v666
          %v696 = vpop.xlane.xlu0 %695
          %697 = vmax.xlane.f32.xlu0 %v667
          %v698 = vpop.xlane.xlu0 %697
          %699 = vmax.xlane.f32.xlu0 %v668
          %v700 = vpop.xlane.xlu0 %699
          %v701 = vsub.f32 %v653, %v670
          %v702 = vsub.f32 %v654, %v672
          %v703 = vsub.f32 %v655, %v674
          %v704 = vsub.f32 %v656, %v676
          %v705 = vsub.f32 %v657, %v678
          %v706 = vsub.f32 %v658, %v680
          %v707 = vsub.f32 %v659, %v682
          %v708 = vsub.f32 %v660, %v684
          %v709 = vsub.f32 %v661, %v686
          %v710 = vsub.f32 %v662, %v688
          %v711 = vsub.f32 %v663, %v690
          %v712 = vsub.f32 %v664, %v692
          %v713 = vsub.f32 %v665, %v694
          %v714 = vsub.f32 %v666, %v696
          %v715 = vsub.f32 %v667, %v698
          %v716 = vsub.f32 %v668, %v700
          %v717 = vmul.f32 %v701, 1.442695
          %v718 = vpow.pop %v717
          %v719 = vmul.f32 %v702, 1.442695
          %v720 = vpow.pop %v719
          %v721 = vmul.f32 %v703, 1.442695
          %v722 = vpow.pop %v721
          %v723 = vmul.f32 %v704, 1.442695
          %v724 = vpow.pop %v723
          %v725 = vmul.f32 %v705, 1.442695
          %v726 = vpow.pop %v725
          %v727 = vmul.f32 %v706, 1.442695
          %v728 = vpow.pop %v727
          %v729 = vmul.f32 %v707, 1.442695
          %v730 = vpow.pop %v729
          %v731 = vmul.f32 %v708, 1.442695
          %v732 = vpow.pop %v731
          %v733 = vmul.f32 %v709, 1.442695
          %v734 = vpow.pop %v733
          %v735 = vmul.f32 %v710, 1.442695
          %v736 = vpow.pop %v735
          %v737 = vmul.f32 %v711, 1.442695
          %v738 = vpow.pop %v737
          %v739 = vmul.f32 %v712, 1.442695
          %v740 = vpow.pop %v739
          %v741 = vmul.f32 %v713, 1.442695
          %v742 = vpow.pop %v741
          %v743 = vmul.f32 %v714, 1.442695
          %v744 = vpow.pop %v743
          %v745 = vmul.f32 %v715, 1.442695
          %v746 = vpow.pop %v745
          %v747 = vmul.f32 %v716, 1.442695
          %v748 = vpow.pop %v747
          %749 = vadd.xlane.f32.xlu0 %v718
          %v750 = vpop.xlane.xlu0 %749
          %751 = vadd.xlane.f32.xlu0 %v720
          %v752 = vpop.xlane.xlu0 %751
          %753 = vadd.xlane.f32.xlu0 %v722
          %v754 = vpop.xlane.xlu0 %753
          %755 = vadd.xlane.f32.xlu0 %v724
          %v756 = vpop.xlane.xlu0 %755
          %757 = vadd.xlane.f32.xlu0 %v726
          %v758 = vpop.xlane.xlu0 %757
          %759 = vadd.xlane.f32.xlu0 %v728
          %v760 = vpop.xlane.xlu0 %759
          %761 = vadd.xlane.f32.xlu0 %v730
          %v762 = vpop.xlane.xlu0 %761
          %763 = vadd.xlane.f32.xlu0 %v732
          %v764 = vpop.xlane.xlu0 %763
          %765 = vadd.xlane.f32.xlu0 %v734
          %v766 = vpop.xlane.xlu0 %765
          %767 = vadd.xlane.f32.xlu0 %v736
          %v768 = vpop.xlane.xlu0 %767
          %769 = vadd.xlane.f32.xlu0 %v738
          %v770 = vpop.xlane.xlu0 %769
          %771 = vadd.xlane.f32.xlu0 %v740
          %v772 = vpop.xlane.xlu0 %771
          %773 = vadd.xlane.f32.xlu0 %v742
          %v774 = vpop.xlane.xlu0 %773
          %775 = vadd.xlane.f32.xlu0 %v744
          %v776 = vpop.xlane.xlu0 %775
          %777 = vadd.xlane.f32.xlu0 %v746
          %v778 = vpop.xlane.xlu0 %777
          %779 = vadd.xlane.f32.xlu0 %v748
          %v780 = vpop.xlane.xlu0 %779
          %v781 = vlog2.pop %v750
          %v782 = vmul.f32 %v781, 0.6931472
          %v783 = vlog2.pop %v752
          %v784 = vmul.f32 %v783, 0.6931472
          %v785 = vlog2.pop %v754
          %v786 = vmul.f32 %v785, 0.6931472
          %v787 = vlog2.pop %v756
          %v788 = vmul.f32 %v787, 0.6931472
          %v789 = vlog2.pop %v758
          %v790 = vmul.f32 %v789, 0.6931472
          %v791 = vlog2.pop %v760
          %v792 = vmul.f32 %v791, 0.6931472
          %v793 = vlog2.pop %v762
          %v794 = vmul.f32 %v793, 0.6931472
          %v795 = vlog2.pop %v764
          %v796 = vmul.f32 %v795, 0.6931472
          %v797 = vlog2.pop %v766
          %v798 = vmul.f32 %v797, 0.6931472
          %v799 = vlog2.pop %v768
          %v800 = vmul.f32 %v799, 0.6931472
          %v801 = vlog2.pop %v770
          %v802 = vmul.f32 %v801, 0.6931472
          %v803 = vlog2.pop %v772
          %v804 = vmul.f32 %v803, 0.6931472
          %v805 = vlog2.pop %v774
          %v806 = vmul.f32 %v805, 0.6931472
          %v807 = vlog2.pop %v776
          %v808 = vmul.f32 %v807, 0.6931472
          %v809 = vlog2.pop %v778
          %v810 = vmul.f32 %v809, 0.6931472
          %v811 = vlog2.pop %v780
          %v812 = vmul.f32 %v811, 0.6931472
          %v813 = vadd.f32 %v782, %v670
          %v814 = vadd.f32 %v784, %v672
          %v815 = vadd.f32 %v786, %v674
          %v816 = vadd.f32 %v788, %v676
          %v817 = vadd.f32 %v790, %v678
          %v818 = vadd.f32 %v792, %v680
          %v819 = vadd.f32 %v794, %v682
          %v820 = vadd.f32 %v796, %v684
          %v821 = vadd.f32 %v798, %v686
          %v822 = vadd.f32 %v800, %v688
          %v823 = vadd.f32 %v802, %v690
          %v824 = vadd.f32 %v804, %v692
          %v825 = vadd.f32 %v806, %v694
          %v826 = vadd.f32 %v808, %v696
          %v827 = vadd.f32 %v810, %v698
          %v828 = vadd.f32 %v812, %v700
          %v829 = vsub.f32 %v634, %v813
          %v830 = vsub.f32 %v635, %v814
          %v831 = vsub.f32 %v636, %v815
          %v832 = vsub.f32 %v637, %v816
          %v833 = vsub.f32 %v638, %v817
          %v834 = vsub.f32 %v639, %v818
          %v835 = vsub.f32 %v640, %v819
          %v836 = vsub.f32 %v641, %v820
          %v837 = vsub.f32 %v642, %v821
          %v838 = vsub.f32 %v643, %v822
          %v839 = vsub.f32 %v644, %v823
          %v840 = vsub.f32 %v645, %v824
          %v841 = vsub.f32 %v646, %v825
          %v842 = vsub.f32 %v647, %v826
          %v843 = vsub.f32 %v648, %v827
          %v844 = vsub.f32 %v649, %v828
          %v845 = vsel %vm652, %v829, 0.0
          %v846 = vsel %vm652, %v830, 0.0
          %v847 = vsel %vm652, %v831, 0.0
          %v848 = vsel %vm652, %v832, 0.0
          %v849 = vsel %vm652, %v833, 0.0
          %v850 = vsel %vm652, %v834, 0.0
          %v851 = vsel %vm652, %v835, 0.0
          %v852 = vsel %vm652, %v836, 0.0
          %v853 = vsel %vm652, %v837, 0.0
          %v854 = vsel %vm652, %v838, 0.0
          %v855 = vsel %vm652, %v839, 0.0
          %v856 = vsel %vm652, %v840, 0.0
          %v857 = vsel %vm652, %v841, 0.0
          %v858 = vsel %vm652, %v842, 0.0
          %v859 = vsel %vm652, %v843, 0.0
          %v860 = vsel %vm652, %v844, 0.0
          %861 = vst [vmem:[%s311] sm:$0xff] %v845
          %862 = vst [vmem:[%s311 + $0x8] sm:$0xff] %v846
          %863 = vst [vmem:[%s311 + $0x10] sm:$0xff] %v847
          %864 = vst [vmem:[%s311 + $0x18] sm:$0xff] %v848
          %865 = vst [vmem:[%s311 + $0x20] sm:$0xff] %v849
          %866 = vst [vmem:[%s311 + $0x28] sm:$0xff] %v850
          %867 = vst [vmem:[%s311 + $0x30] sm:$0xff] %v851
          %868 = vst [vmem:[%s311 + $0x38] sm:$0xff] %v852
          %869 = vst [vmem:[%s311 + $0x40] sm:$0xff] %v853
          %870 = vst [vmem:[%s311 + $0x48] sm:$0xff] %v854
          %871 = vst [vmem:[%s311 + $0x50] sm:$0xff] %v855
          %872 = vst [vmem:[%s311 + $0x58] sm:$0xff] %v856
          %873 = vst [vmem:[%s311 + $0x60] sm:$0xff] %v857
          %874 = vst [vmem:[%s311 + $0x68] sm:$0xff] %v858
          %875 = vst [vmem:[%s311 + $0x70] sm:$0xff] %v859
          %876 = vst [vmem:[%s311 + $0x78] sm:$0xff] %v860
        $region81: #{gcn_forward.7} parent=68 // pred_fallthru
          _
        %s877 = smul.u32 16, %s18
        %p878 = scmp.lt.s32.totalorder %s877, 31
        %s879 = scalar_select %p878, %s877, 31
        %s880 = smul.addr %s879, 8
        %s881 = scalar_lea.vmem %s3, %s880
        // Predicated region
        $region82: #{gcn_forward.7} parent=68 // pred_check
          %p882 = pneg %p119
        $region83: #{gcn_forward.7} parent=68 // pred_check_branch
          %884 = sbr.rel (%p882) target = $region85
        $region84: #{gcn_forward.7} parent=68 // pred_region
          %s885 = smul.u32 16, %s18
        $region85: #{gcn_forward.7} parent=68 // pred_fallthru
          _
      $region69: #{gcn_forward.7} parent=5 // pred_fallthru
        _
      %p886 = scmp.le.s32.totalorder 2, %s9
      // Predicated region
      $region86: #{gcn_forward.7} parent=5 // pred_check
        %p887 = pneg %p886
      $region87: #{gcn_forward.7} parent=5 // pred_check_branch
        %889 = sbr.rel (%p887) target = $region89
      $region88: #{gcn_forward.7} parent=5 // pred_region
        %s890 = ssub.s32 %s9, 2
        // Predicated region
        $region90: #{gcn_forward.7} parent=88 // pred_check
          %p891 = pneg %p125
        $region91: #{gcn_forward.7} parent=88 // pred_check_branch
          %893 = sbr.rel (%p891) target = $region93
        $region92: #{gcn_forward.7} parent=88 // pred_region
          %s894 = smul.u32 16, %s20
          %p895 = scmp.lt.s32.totalorder %s894, 31
          %s896 = scalar_select %p895, %s894, 31
          %s897 = smul.addr %s896, 8
          %s898 = scalar_lea.vmem %s3, %s897
        $region93: #{gcn_forward.7} parent=88 // pred_fallthru
          _
      $region89: #{gcn_forward.7} parent=5 // pred_fallthru
        _
    $region6: #{gcn_forward.7} parent=1 // loop_footer
      %s13 = sadd.s32 1, %s9
    $region7: #{gcn_forward.7} parent=1 // loop_footer_branch
      %8 = sbr.rel target = $region3
    $region8: #{gcn_forward.7} parent=1 // loop_exit
      _

</llo_original>
